<compile_context>
chip_gen: v5e
topology: v5e:2x2
jax: 0.10.0
libtpu: 0.0.40
codegen_flags: <defaults>
</compile_context>

<pallas_src>
import jax
import jax.numpy as jnp
from jax.experimental import pallas as pl
from jax.experimental.pallas import tpu as pltpu

LANE = 128      # TPU vreg lane width
SUBLANE = 8     # f32 sublane count


def _round_up(x, m):
    return (x + m - 1) // m * m


def _choose_time_chunk(seq_len, bp, hp,
                       vmem_budget_bytes=8 << 20, max_unroll=64):
    """Largest divisor of seq_len whose double-buffered chunk fits the budget.

    Per-timestep VMEM traffic: gate-input block (Bp * 4Hp * 4B) + output block
    (Bp * Hp * 4B), each double-buffered by the pipeline.
    """
    per_t = 2 * (bp * 4 * hp * 4 + bp * hp * 4)          # double-buffered bytes
    cap = max(1, min(max_unroll, vmem_budget_bytes // max(per_t, 1)))
    for t in range(min(seq_len, cap), 0, -1):
        if seq_len % t == 0:
            return t
    return 1


# ----------------------------------------------------------------------------
# Pallas kernel: the serial LSTM recurrence for one layer, chunked over time.
# grid = (S // Tt,)  -- sequential ("arbitrary") recurrence over time chunks.
# Gate layout inside 4*Hp is (i, f, o, g): sigmoid on [:3Hp], tanh on [3Hp:].
# ----------------------------------------------------------------------------
def lstm_recurrence_kernel(gin_ref, whh_ref, out_ref, h_out_ref, c_out_ref,
                           h_sc, c_sc):
    """One time-chunk of the LSTM recurrence.

    gin_ref : (Tt, Bp, 4*Hp)  precomputed x_t @ W_ih + b for this chunk
    whh_ref : (Hp, 4*Hp)      recurrent weights (resident, constant index map)
    out_ref : (Tt, Bp, Hp)    per-timestep hidden outputs for this chunk
    h_out_ref, c_out_ref : (Bp, Hp)  final state (written on last chunk only)
    h_sc, c_sc : (Bp, Hp)     state carried across grid steps (VMEM scratch)
    """
    chunk = pl.program_id(0)

    # h0 = c0 = 0, as in PyTorch's default.
    @pl.when(chunk == 0)
    def _():
        h_sc[...] = jnp.zeros_like(h_sc)
        c_sc[...] = jnp.zeros_like(c_sc)

    hp = h_sc.shape[1]
    tt = gin_ref.shape[0]
    w_hh = whh_ref[...]          # hoisted out of the unrolled time loop

    def step(t, carry):
        h_prev = h_sc[...]
        c_prev = c_sc[...]
        # Only the recurrent matmul sits on the serial critical path.
        gates = gin_ref[t] + jnp.dot(h_prev, w_hh,
                                     preferred_element_type=jnp.float32)
        # Packed gate order (i, f, o, g): one sigmoid slab + one tanh slab.
        sig = jax.nn.sigmoid(gates[:, 0:3 * hp])
        g_g = jnp.tanh(gates[:, 3 * hp:4 * hp])
        i_g = sig[:, 0 * hp:1 * hp]
        f_g = sig[:, 1 * hp:2 * hp]
        o_g = sig[:, 2 * hp:3 * hp]
        c_new = f_g * c_prev + i_g * g_g
        h_new = o_g * jnp.tanh(c_new)
        h_sc[...] = h_new
        c_sc[...] = c_new
        out_ref[t] = h_new       # lane-dense (Hp = multiple of 128) store
        return carry

    jax.lax.fori_loop(0, tt, step, 0, unroll=True)

    # Write final (h, c) only once, on the last chunk.
    @pl.when(chunk == pl.num_programs(0) - 1)
    def _():
        h_out_ref[...] = h_sc[...]
        c_out_ref[...] = c_sc[...]


def lstm_layer_recurrent(gates_in, w_hh_p, time_chunk):
    """Run the recurrence for one layer.

    gates_in : (S, Bp, 4*Hp) f32 -- precomputed x @ W_ih + b (i,f,o,g packed)
    w_hh_p   : (Hp, 4*Hp)    f32 -- zero-padded recurrent weights (same pack)
    Returns (out (S, Bp, Hp), h_final (Bp, Hp), c_final (Bp, Hp)).
    """
    S, Bp, G = gates_in.shape
    Hp = G // 4
    Tt = time_chunk
    n_chunks = S // Tt

    out_shapes = (
        jax.ShapeDtypeStruct((S, Bp, Hp), jnp.float32),
        jax.ShapeDtypeStruct((Bp, Hp), jnp.float32),
        jax.ShapeDtypeStruct((Bp, Hp), jnp.float32),
    )

    grid_spec = pltpu.PrefetchScalarGridSpec(
        num_scalar_prefetch=0,
        grid=(n_chunks,),
        in_specs=[
            pl.BlockSpec((Tt, Bp, 4 * Hp), lambda c: (c, 0, 0)),  # input gates
            # Resident recurrent weights (constant index map: fetched once).
            # For very large H on v7x, stream via memory_space=pl.ANY instead.
            pl.BlockSpec((Hp, 4 * Hp), lambda c: (0, 0)),
        ],
        out_specs=[
            pl.BlockSpec((Tt, Bp, Hp), lambda c: (c, 0, 0)),      # output seq
            pl.BlockSpec((Bp, Hp), lambda c: (0, 0)),             # final h
            pl.BlockSpec((Bp, Hp), lambda c: (0, 0)),             # final c
        ],
        scratch_shapes=[
            pltpu.VMEM((Bp, Hp), jnp.float32),                    # carried h
            pltpu.VMEM((Bp, Hp), jnp.float32),                    # carried c
        ],
    )

    return pl.pallas_call(
        lstm_recurrence_kernel,
        out_shape=out_shapes,
        grid_spec=grid_spec,
        compiler_params=pltpu.CompilerParams(
            dimension_semantics=("arbitrary",)),                  # serial time
    )(gates_in, w_hh_p)


# ----------------------------------------------------------------------------
# Weight packing helpers.
# PyTorch gate order is (i, f, g, o); the kernel uses (i, f, o, g) so the three
# sigmoid gates are contiguous.  Each gate's H real columns are zero-padded to
# an Hp-wide (lane-aligned) slot; zero padding keeps padded state exactly 0.
# ----------------------------------------------------------------------------
def _pack_gates(w, H, Hp):
    i, f, g, o = jnp.split(w, 4, axis=-1)
    if H != Hp:
        pad = [(0, 0)] * (w.ndim - 1) + [(0, Hp - H)]
        i, f, g, o = (jnp.pad(p, pad) for p in (i, f, g, o))
    return jnp.concatenate([i, f, o, g], axis=-1)


def _pad_rows(w, rows_p):
    r = w.shape[0]
    if r == rows_p:
        return w
    return jnp.pad(w, ((0, rows_p - r),) + ((0, 0),) * (w.ndim - 1))


# ----------------------------------------------------------------------------
# Encoder: parameters + forward
# ----------------------------------------------------------------------------
def init_encoder_params(key, input_dim, emb_dim, hid_dim, n_layers):
    """Deterministic init mirroring PyTorch shapes (weights stored transposed)."""
    params = {}
    k_emb, key = jax.random.split(key)
    params["embedding"] = jax.random.normal(
        k_emb, (input_dim, emb_dim), dtype=jnp.float32)     # nn.Embedding ~ N(0,1)

    bound = 1.0 / jnp.sqrt(hid_dim)
    layers = []
    for layer in range(n_layers):
        in_dim = emb_dim if layer == 0 else hid_dim
        key, k1, k2, k3, k4 = jax.random.split(key, 5)
        w_ih = jax.random.uniform(k1, (in_dim, 4 * hid_dim),
                                  minval=-bound, maxval=bound, dtype=jnp.float32)
        w_hh = jax.random.uniform(k2, (hid_dim, 4 * hid_dim),
                                  minval=-bound, maxval=bound, dtype=jnp.float32)
        b_ih = jax.random.uniform(k3, (4 * hid_dim,),
                                  minval=-bound, maxval=bound, dtype=jnp.float32)
        b_hh = jax.random.uniform(k4, (4 * hid_dim,),
                                  minval=-bound, maxval=bound, dtype=jnp.float32)
        layers.append({"w_ih": w_ih, "w_hh": w_hh, "b": b_ih + b_hh})
    params["lstm"] = layers
    return params


@jax.jit
def encoder_forward(params, src):
    """src: (seq_len, batch) int32 token ids.
    Returns (output (S,B,H), hidden (n_layers,B,H), cell (n_layers,B,H))."""
    emb = params["embedding"]
    H = params["lstm"][0]["w_hh"].shape[0]
    S, B = src.shape
    Bp = _round_up(B, SUBLANE)      # sublane-aligned batch
    Hp = _round_up(H, LANE)         # lane-aligned hidden (4*Hp multiple of 256)
    Tt = _choose_time_chunk(S, Bp, Hp)

    # Embedding lookup (gather) -- plain-JAX glue.
    x = jnp.take(emb, src, axis=0)                          # (S, B, E)
    # Dropout: inference-mode identity (deterministic forward).
    # TODO(synk): training-mode dropout mask (pltpu.prng_random_bits) not applied.
    x = jnp.pad(x, ((0, 0), (0, Bp - B), (0, 0)))           # (S, Bp, E)

    hiddens, cells = [], []
    for lp in params["lstm"]:
        in_rows = x.shape[-1]                               # E (layer 0) or Hp
        w_ih_p = _pack_gates(_pad_rows(lp["w_ih"], in_rows), H, Hp)
        w_hh_p = _pack_gates(_pad_rows(lp["w_hh"], Hp), H, Hp)
        b_p = _pack_gates(lp["b"], H, Hp)

        # Hoisted input projection: one large MXU-friendly GEMM over the whole
        # sequence, off the serial critical path.
        g_in = (x.reshape(S * Bp, in_rows) @ w_ih_p + b_p).reshape(S, Bp, 4 * Hp)

        out, h, c = lstm_layer_recurrent(g_in, w_hh_p, Tt)
        hiddens.append(h[:B, :H])
        cells.append(c[:B, :H])
        x = out          # keep padded (S, Bp, Hp) activations between layers
        # TODO(synk): inter-layer activations could stay in VMEM with a fully
        # fused multi-layer pallas_call; kept per-layer for clarity here.

    output = x[:, :B, :H]
    hidden = jnp.stack(hiddens, axis=0)                     # (n_layers, B, H)
    cell = jnp.stack(cells, axis=0)                         # (n_layers, B, H)
    return output, hidden, cell


# ----------------------------------------------------------------------------
# Pure-JAX reference (sanity check of the kernel semantics)
# ----------------------------------------------------------------------------
def encoder_forward_ref(params, src):
    embedded = jnp.take(params["embedding"], src, axis=0)
    x = embedded
    hiddens, cells = [], []
    for lp in params["lstm"]:
        S, B, _ = x.shape
        H = lp["w_hh"].shape[0]

        def step(carry, x_t):
            h, c = carry
            gates = x_t @ lp["w_ih"] + h @ lp["w_hh"] + lp["b"]
            i = jax.nn.sigmoid(gates[:, 0 * H:1 * H])
            f = jax.nn.sigmoid(gates[:, 1 * H:2 * H])
            g = jnp.tanh(gates[:, 2 * H:3 * H])
            o = jax.nn.sigmoid(gates[:, 3 * H:4 * H])
            c = f * c + i * g
            h = o * jnp.tanh(c)
            return (h, c), h

        (h, c), out = jax.lax.scan(
            step, (jnp.zeros((B, H), jnp.float32), jnp.zeros((B, H), jnp.float32)), x)
        hiddens.append(h)
        cells.append(c)
        x = out
    return x, jnp.stack(hiddens), jnp.stack(cells)


if __name__ == "__main__":
    INPUT_DIM = 20    # vocab size
    EMB_DIM = 16
    HID_DIM = 32
    N_LAYERS = 2
    SEQ_LEN = 8
    BATCH = 2

    key = jax.random.PRNGKey(0)
    k_params, k_src = jax.random.split(key)
    params = init_encoder_params(k_params, INPUT_DIM, EMB_DIM, HID_DIM, N_LAYERS)
    src = jax.random.randint(k_src, (SEQ_LEN, BATCH), 0, INPUT_DIM, dtype=jnp.int32)

    output, hidden, cell = encoder_forward(params, src)
    jax.block_until_ready((output, hidden, cell))

    # Sanity-check against the pure-JAX reference.
    ref_out, ref_h, ref_c = encoder_forward_ref(params, src)
    assert output.shape == (SEQ_LEN, BATCH, HID_DIM)
    assert hidden.shape == (N_LAYERS, BATCH, HID_DIM)
    assert cell.shape == (N_LAYERS, BATCH, HID_DIM)
    assert jnp.allclose(output, ref_out, atol=1e-4), "output mismatch"
    assert jnp.allclose(hidden, ref_h, atol=1e-4), "hidden mismatch"
    assert jnp.allclose(cell, ref_c, atol=1e-4), "cell mismatch"

    print("KERNEL_OK")
</pallas_src>

<mosaic_0001>
module attributes {stable_mosaic.version = 11 : i64} {
  func.func @lstm_recurrence_kernel(%arg0: i32, %arg1: memref<8x8x512xf32, #tpu.memory_space<vmem>>, %arg2: memref<128x512xf32, #tpu.memory_space<vmem>>, %arg3: memref<8x8x128xf32, #tpu.memory_space<vmem>>, %arg4: memref<8x128xf32, #tpu.memory_space<vmem>>, %arg5: memref<8x128xf32, #tpu.memory_space<vmem>>, %arg6: memref<8x128xf32, #tpu.memory_space<vmem>>, %arg7: memref<8x128xf32, #tpu.memory_space<vmem>>) attributes {dimension_semantics = [#tpu.dimension_semantics<arbitrary>], iteration_bounds = array<i64: 1>, scalar_prefetch = 0 : i64, scratch_operands = 2 : i64, tpu.core_type = #tpu.core_type<tc>, window_params = [{transform_indices = @transform_0, window_bounds = array<i64: 8, 8, 512>}, {pipeline_mode = #tpu.pipeline_mode<synchronous>, transform_indices = @transform_1, window_bounds = array<i64: 128, 512>}, {transform_indices = @transform_2, window_bounds = array<i64: 8, 8, 128>}, {pipeline_mode = #tpu.pipeline_mode<synchronous>, transform_indices = @transform_3, window_bounds = array<i64: 8, 128>}, {pipeline_mode = #tpu.pipeline_mode<synchronous>, transform_indices = @transform_4, window_bounds = array<i64: 8, 128>}]} {
    %c0_i32 = arith.constant 0 : i32
    %0 = arith.cmpi eq, %arg0, %c0_i32 : i32
    %1 = arith.extui %0 : i1 to i32
    %c0_i32_0 = arith.constant 0 : i32
    %2 = arith.cmpi ne, %1, %c0_i32_0 : i32
    scf.if %2 {
      %cst_116 = arith.constant 0.000000e+00 : f32
      %239 = vector.broadcast %cst_116 : f32 to vector<8x128xf32>
      %c0_117 = arith.constant 0 : index
      %c0_118 = arith.constant 0 : index
      %240 = vector.load %arg6[%c0_117, %c0_118] : memref<8x128xf32, #tpu.memory_space<vmem>>, vector<8x128xf32>
      tpu.vector_store %arg6[%c0_117, %c0_118], %239 {strides = array<i32>} : memref<8x128xf32, #tpu.memory_space<vmem>>, vector<8x128xf32>,
      %cst_119 = arith.constant 0.000000e+00 : f32
      %241 = vector.broadcast %cst_119 : f32 to vector<8x128xf32>
      %c0_120 = arith.constant 0 : index
      %c0_121 = arith.constant 0 : index
      %242 = vector.load %arg7[%c0_120, %c0_121] : memref<8x128xf32, #tpu.memory_space<vmem>>, vector<8x128xf32>
      tpu.vector_store %arg7[%c0_120, %c0_121], %241 {strides = array<i32>} : memref<8x128xf32, #tpu.memory_space<vmem>>, vector<8x128xf32>,
    } else {
    }
    %c0 = arith.constant 0 : index
    %c0_1 = arith.constant 0 : index
    %3 = vector.load %arg2[%c0, %c0_1] : memref<128x512xf32, #tpu.memory_space<vmem>>, vector<128x512xf32>
    %c0_i32_2 = arith.constant 0 : i32
    %c0_3 = arith.constant 0 : index
    %c0_4 = arith.constant 0 : index
    %4 = vector.load %arg6[%c0_3, %c0_4] : memref<8x128xf32, #tpu.memory_space<vmem>>, vector<8x128xf32>
    %c0_5 = arith.constant 0 : index
    %c0_6 = arith.constant 0 : index
    %5 = vector.load %arg7[%c0_5, %c0_6] : memref<8x128xf32, #tpu.memory_space<vmem>>, vector<8x128xf32>
    %6 = arith.index_cast %c0_i32_2 : i32 to index
    %c0_7 = arith.constant 0 : index
    %c0_8 = arith.constant 0 : index
    %7 = vector.load %arg1[%6, %c0_7, %c0_8] : memref<8x8x512xf32, #tpu.memory_space<vmem>>, vector<1x8x512xf32>
    %8 = vector.shape_cast %7 : vector<1x8x512xf32> to vector<8x512xf32>
    %cst = arith.constant dense<0.000000e+00> : vector<8x512xf32>
    %9 = tpu.matmul %4, %3, %cst {dimension_numbers = #tpu.dot_dimension_numbers<[1], [0], [0], [1], [0, 0, 1, 1], [], []>} : vector<8x128xf32>, vector<128x512xf32>, vector<8x512xf32> -> vector<8x512xf32>
    %10 = arith.addf %8, %9 : vector<8x512xf32>
    %11 = vector.extract_strided_slice %10 {offsets = [0, 0], sizes = [8, 384], strides = [1, 1]} : vector<8x512xf32> to vector<8x384xf32>
    %12 = arith.negf %11 : vector<8x384xf32>
    %13 = math.exp %12 : vector<8x384xf32>
    %cst_9 = arith.constant 1.000000e+00 : f32
    %14 = vector.broadcast %cst_9 : f32 to vector<8x384xf32>
    %15 = arith.addf %14, %13 : vector<8x384xf32>
    %16 = arith.divf %14, %15 : vector<8x384xf32>
    %17 = vector.extract_strided_slice %10 {offsets = [0, 384], sizes = [8, 128], strides = [1, 1]} : vector<8x512xf32> to vector<8x128xf32>
    %18 = math.tanh %17 : vector<8x128xf32>
    %19 = vector.extract_strided_slice %16 {offsets = [0, 0], sizes = [8, 128], strides = [1, 1]} : vector<8x384xf32> to vector<8x128xf32>
    %20 = vector.extract_strided_slice %16 {offsets = [0, 128], sizes = [8, 128], strides = [1, 1]} : vector<8x384xf32> to vector<8x128xf32>
    %21 = vector.extract_strided_slice %16 {offsets = [0, 256], sizes = [8, 128], strides = [1, 1]} : vector<8x384xf32> to vector<8x128xf32>
    %22 = arith.mulf %20, %5 : vector<8x128xf32>
    %23 = arith.mulf %19, %18 : vector<8x128xf32>
    %24 = arith.addf %22, %23 : vector<8x128xf32>
    %25 = math.tanh %24 : vector<8x128xf32>
    %26 = arith.mulf %21, %25 : vector<8x128xf32>
    %c0_10 = arith.constant 0 : index
    %c0_11 = arith.constant 0 : index
    %27 = vector.load %arg6[%c0_10, %c0_11] : memref<8x128xf32, #tpu.memory_space<vmem>>, vector<8x128xf32>
    tpu.vector_store %arg6[%c0_10, %c0_11], %26 {strides = array<i32>} : memref<8x128xf32, #tpu.memory_space<vmem>>, vector<8x128xf32>,
    %c0_12 = arith.constant 0 : index
    %c0_13 = arith.constant 0 : index
    %28 = vector.load %arg7[%c0_12, %c0_13] : memref<8x128xf32, #tpu.memory_space<vmem>>, vector<8x128xf32>
    tpu.vector_store %arg7[%c0_12, %c0_13], %24 {strides = array<i32>} : memref<8x128xf32, #tpu.memory_space<vmem>>, vector<8x128xf32>,
    %29 = arith.index_cast %c0_i32_2 : i32 to index
    %c0_14 = arith.constant 0 : index
    %c0_15 = arith.constant 0 : index
    %30 = vector.load %arg3[%29, %c0_14, %c0_15] : memref<8x8x128xf32, #tpu.memory_space<vmem>>, vector<1x8x128xf32>
    %31 = vector.shape_cast %30 : vector<1x8x128xf32> to vector<8x128xf32>
    %32 = vector.shape_cast %26 : vector<8x128xf32> to vector<1x8x128xf32>
    tpu.vector_store %arg3[%29, %c0_14, %c0_15], %32 {strides = array<i32>} : memref<8x8x128xf32, #tpu.memory_space<vmem>>, vector<1x8x128xf32>,
    %c1_i32 = arith.constant 1 : i32
    %c0_16 = arith.constant 0 : index
    %c0_17 = arith.constant 0 : index
    %33 = vector.load %arg6[%c0_16, %c0_17] : memref<8x128xf32, #tpu.memory_space<vmem>>, vector<8x128xf32>
    %c0_18 = arith.constant 0 : index
    %c0_19 = arith.constant 0 : index
    %34 = vector.load %arg7[%c0_18, %c0_19] : memref<8x128xf32, #tpu.memory_space<vmem>>, vector<8x128xf32>
    %35 = arith.index_cast %c1_i32 : i32 to index
    %c0_20 = arith.constant 0 : index
    %c0_21 = arith.constant 0 : index
    %36 = vector.load %arg1[%35, %c0_20, %c0_21] : memref<8x8x512xf32, #tpu.memory_space<vmem>>, vector<1x8x512xf32>
    %37 = vector.shape_cast %36 : vector<1x8x512xf32> to vector<8x512xf32>
    %cst_22 = arith.constant dense<0.000000e+00> : vector<8x512xf32>
    %38 = tpu.matmul %33, %3, %cst_22 {dimension_numbers = #tpu.dot_dimension_numbers<[1], [0], [0], [1], [0, 0, 1, 1], [], []>} : vector<8x128xf32>, vector<128x512xf32>, vector<8x512xf32> -> vector<8x512xf32>
    %39 = arith.addf %37, %38 : vector<8x512xf32>
    %40 = vector.extract_strided_slice %39 {offsets = [0, 0], sizes = [8, 384], strides = [1, 1]} : vector<8x512xf32> to vector<8x384xf32>
    %41 = arith.negf %40 : vector<8x384xf32>
    %42 = math.exp %41 : vector<8x384xf32>
    %cst_23 = arith.constant 1.000000e+00 : f32
    %43 = vector.broadcast %cst_23 : f32 to vector<8x384xf32>
    %44 = arith.addf %43, %42 : vector<8x384xf32>
    %45 = arith.divf %43, %44 : vector<8x384xf32>
    %46 = vector.extract_strided_slice %39 {offsets = [0, 384], sizes = [8, 128], strides = [1, 1]} : vector<8x512xf32> to vector<8x128xf32>
    %47 = math.tanh %46 : vector<8x128xf32>
    %48 = vector.extract_strided_slice %45 {offsets = [0, 0], sizes = [8, 128], strides = [1, 1]} : vector<8x384xf32> to vector<8x128xf32>
    %49 = vector.extract_strided_slice %45 {offsets = [0, 128], sizes = [8, 128], strides = [1, 1]} : vector<8x384xf32> to vector<8x128xf32>
    %50 = vector.extract_strided_slice %45 {offsets = [0, 256], sizes = [8, 128], strides = [1, 1]} : vector<8x384xf32> to vector<8x128xf32>
    %51 = arith.mulf %49, %34 : vector<8x128xf32>
    %52 = arith.mulf %48, %47 : vector<8x128xf32>
    %53 = arith.addf %51, %52 : vector<8x128xf32>
    %54 = math.tanh %53 : vector<8x128xf32>
    %55 = arith.mulf %50, %54 : vector<8x128xf32>
    %c0_24 = arith.constant 0 : index
    %c0_25 = arith.constant 0 : index
    %56 = vector.load %arg6[%c0_24, %c0_25] : memref<8x128xf32, #tpu.memory_space<vmem>>, vector<8x128xf32>
    tpu.vector_store %arg6[%c0_24, %c0_25], %55 {strides = array<i32>} : memref<8x128xf32, #tpu.memory_space<vmem>>, vector<8x128xf32>,
    %c0_26 = arith.constant 0 : index
    %c0_27 = arith.constant 0 : index
    %57 = vector.load %arg7[%c0_26, %c0_27] : memref<8x128xf32, #tpu.memory_space<vmem>>, vector<8x128xf32>
    tpu.vector_store %arg7[%c0_26, %c0_27], %53 {strides = array<i32>} : memref<8x128xf32, #tpu.memory_space<vmem>>, vector<8x128xf32>,
    %58 = arith.index_cast %c1_i32 : i32 to index
    %c0_28 = arith.constant 0 : index
    %c0_29 = arith.constant 0 : index
    %59 = vector.load %arg3[%58, %c0_28, %c0_29] : memref<8x8x128xf32, #tpu.memory_space<vmem>>, vector<1x8x128xf32>
    %60 = vector.shape_cast %59 : vector<1x8x128xf32> to vector<8x128xf32>
    %61 = vector.shape_cast %55 : vector<8x128xf32> to vector<1x8x128xf32>
    tpu.vector_store %arg3[%58, %c0_28, %c0_29], %61 {strides = array<i32>} : memref<8x8x128xf32, #tpu.memory_space<vmem>>, vector<1x8x128xf32>,
    %c2_i32 = arith.constant 2 : i32
    %c0_30 = arith.constant 0 : index
    %c0_31 = arith.constant 0 : index
    %62 = vector.load %arg6[%c0_30, %c0_31] : memref<8x128xf32, #tpu.memory_space<vmem>>, vector<8x128xf32>
    %c0_32 = arith.constant 0 : index
    %c0_33 = arith.constant 0 : index
    %63 = vector.load %arg7[%c0_32, %c0_33] : memref<8x128xf32, #tpu.memory_space<vmem>>, vector<8x128xf32>
    %64 = arith.index_cast %c2_i32 : i32 to index
    %c0_34 = arith.constant 0 : index
    %c0_35 = arith.constant 0 : index
    %65 = vector.load %arg1[%64, %c0_34, %c0_35] : memref<8x8x512xf32, #tpu.memory_space<vmem>>, vector<1x8x512xf32>
    %66 = vector.shape_cast %65 : vector<1x8x512xf32> to vector<8x512xf32>
    %cst_36 = arith.constant dense<0.000000e+00> : vector<8x512xf32>
    %67 = tpu.matmul %62, %3, %cst_36 {dimension_numbers = #tpu.dot_dimension_numbers<[1], [0], [0], [1], [0, 0, 1, 1], [], []>} : vector<8x128xf32>, vector<128x512xf32>, vector<8x512xf32> -> vector<8x512xf32>
    %68 = arith.addf %66, %67 : vector<8x512xf32>
    %69 = vector.extract_strided_slice %68 {offsets = [0, 0], sizes = [8, 384], strides = [1, 1]} : vector<8x512xf32> to vector<8x384xf32>
    %70 = arith.negf %69 : vector<8x384xf32>
    %71 = math.exp %70 : vector<8x384xf32>
    %cst_37 = arith.constant 1.000000e+00 : f32
    %72 = vector.broadcast %cst_37 : f32 to vector<8x384xf32>
    %73 = arith.addf %72, %71 : vector<8x384xf32>
    %74 = arith.divf %72, %73 : vector<8x384xf32>
    %75 = vector.extract_strided_slice %68 {offsets = [0, 384], sizes = [8, 128], strides = [1, 1]} : vector<8x512xf32> to vector<8x128xf32>
    %76 = math.tanh %75 : vector<8x128xf32>
    %77 = vector.extract_strided_slice %74 {offsets = [0, 0], sizes = [8, 128], strides = [1, 1]} : vector<8x384xf32> to vector<8x128xf32>
    %78 = vector.extract_strided_slice %74 {offsets = [0, 128], sizes = [8, 128], strides = [1, 1]} : vector<8x384xf32> to vector<8x128xf32>
    %79 = vector.extract_strided_slice %74 {offsets = [0, 256], sizes = [8, 128], strides = [1, 1]} : vector<8x384xf32> to vector<8x128xf32>
    %80 = arith.mulf %78, %63 : vector<8x128xf32>
    %81 = arith.mulf %77, %76 : vector<8x128xf32>
    %82 = arith.addf %80, %81 : vector<8x128xf32>
    %83 = math.tanh %82 : vector<8x128xf32>
    %84 = arith.mulf %79, %83 : vector<8x128xf32>
    %c0_38 = arith.constant 0 : index
    %c0_39 = arith.constant 0 : index
    %85 = vector.load %arg6[%c0_38, %c0_39] : memref<8x128xf32, #tpu.memory_space<vmem>>, vector<8x128xf32>
    tpu.vector_store %arg6[%c0_38, %c0_39], %84 {strides = array<i32>} : memref<8x128xf32, #tpu.memory_space<vmem>>, vector<8x128xf32>,
    %c0_40 = arith.constant 0 : index
    %c0_41 = arith.constant 0 : index
    %86 = vector.load %arg7[%c0_40, %c0_41] : memref<8x128xf32, #tpu.memory_space<vmem>>, vector<8x128xf32>
    tpu.vector_store %arg7[%c0_40, %c0_41], %82 {strides = array<i32>} : memref<8x128xf32, #tpu.memory_space<vmem>>, vector<8x128xf32>,
    %87 = arith.index_cast %c2_i32 : i32 to index
    %c0_42 = arith.constant 0 : index
    %c0_43 = arith.constant 0 : index
    %88 = vector.load %arg3[%87, %c0_42, %c0_43] : memref<8x8x128xf32, #tpu.memory_space<vmem>>, vector<1x8x128xf32>
    %89 = vector.shape_cast %88 : vector<1x8x128xf32> to vector<8x128xf32>
    %90 = vector.shape_cast %84 : vector<8x128xf32> to vector<1x8x128xf32>
    tpu.vector_store %arg3[%87, %c0_42, %c0_43], %90 {strides = array<i32>} : memref<8x8x128xf32, #tpu.memory_space<vmem>>, vector<1x8x128xf32>,
    %c3_i32 = arith.constant 3 : i32
    %c0_44 = arith.constant 0 : index
    %c0_45 = arith.constant 0 : index
    %91 = vector.load %arg6[%c0_44, %c0_45] : memref<8x128xf32, #tpu.memory_space<vmem>>, vector<8x128xf32>
    %c0_46 = arith.constant 0 : index
    %c0_47 = arith.constant 0 : index
    %92 = vector.load %arg7[%c0_46, %c0_47] : memref<8x128xf32, #tpu.memory_space<vmem>>, vector<8x128xf32>
    %93 = arith.index_cast %c3_i32 : i32 to index
    %c0_48 = arith.constant 0 : index
    %c0_49 = arith.constant 0 : index
    %94 = vector.load %arg1[%93, %c0_48, %c0_49] : memref<8x8x512xf32, #tpu.memory_space<vmem>>, vector<1x8x512xf32>
    %95 = vector.shape_cast %94 : vector<1x8x512xf32> to vector<8x512xf32>
    %cst_50 = arith.constant dense<0.000000e+00> : vector<8x512xf32>
    %96 = tpu.matmul %91, %3, %cst_50 {dimension_numbers = #tpu.dot_dimension_numbers<[1], [0], [0], [1], [0, 0, 1, 1], [], []>} : vector<8x128xf32>, vector<128x512xf32>, vector<8x512xf32> -> vector<8x512xf32>
    %97 = arith.addf %95, %96 : vector<8x512xf32>
    %98 = vector.extract_strided_slice %97 {offsets = [0, 0], sizes = [8, 384], strides = [1, 1]} : vector<8x512xf32> to vector<8x384xf32>
    %99 = arith.negf %98 : vector<8x384xf32>
    %100 = math.exp %99 : vector<8x384xf32>
    %cst_51 = arith.constant 1.000000e+00 : f32
    %101 = vector.broadcast %cst_51 : f32 to vector<8x384xf32>
    %102 = arith.addf %101, %100 : vector<8x384xf32>
    %103 = arith.divf %101, %102 : vector<8x384xf32>
    %104 = vector.extract_strided_slice %97 {offsets = [0, 384], sizes = [8, 128], strides = [1, 1]} : vector<8x512xf32> to vector<8x128xf32>
    %105 = math.tanh %104 : vector<8x128xf32>
    %106 = vector.extract_strided_slice %103 {offsets = [0, 0], sizes = [8, 128], strides = [1, 1]} : vector<8x384xf32> to vector<8x128xf32>
    %107 = vector.extract_strided_slice %103 {offsets = [0, 128], sizes = [8, 128], strides = [1, 1]} : vector<8x384xf32> to vector<8x128xf32>
    %108 = vector.extract_strided_slice %103 {offsets = [0, 256], sizes = [8, 128], strides = [1, 1]} : vector<8x384xf32> to vector<8x128xf32>
    %109 = arith.mulf %107, %92 : vector<8x128xf32>
    %110 = arith.mulf %106, %105 : vector<8x128xf32>
    %111 = arith.addf %109, %110 : vector<8x128xf32>
    %112 = math.tanh %111 : vector<8x128xf32>
    %113 = arith.mulf %108, %112 : vector<8x128xf32>
    %c0_52 = arith.constant 0 : index
    %c0_53 = arith.constant 0 : index
    %114 = vector.load %arg6[%c0_52, %c0_53] : memref<8x128xf32, #tpu.memory_space<vmem>>, vector<8x128xf32>
    tpu.vector_store %arg6[%c0_52, %c0_53], %113 {strides = array<i32>} : memref<8x128xf32, #tpu.memory_space<vmem>>, vector<8x128xf32>,
    %c0_54 = arith.constant 0 : index
    %c0_55 = arith.constant 0 : index
    %115 = vector.load %arg7[%c0_54, %c0_55] : memref<8x128xf32, #tpu.memory_space<vmem>>, vector<8x128xf32>
    tpu.vector_store %arg7[%c0_54, %c0_55], %111 {strides = array<i32>} : memref<8x128xf32, #tpu.memory_space<vmem>>, vector<8x128xf32>,
    %116 = arith.index_cast %c3_i32 : i32 to index
    %c0_56 = arith.constant 0 : index
    %c0_57 = arith.constant 0 : index
    %117 = vector.load %arg3[%116, %c0_56, %c0_57] : memref<8x8x128xf32, #tpu.memory_space<vmem>>, vector<1x8x128xf32>
    %118 = vector.shape_cast %117 : vector<1x8x128xf32> to vector<8x128xf32>
    %119 = vector.shape_cast %113 : vector<8x128xf32> to vector<1x8x128xf32>
    tpu.vector_store %arg3[%116, %c0_56, %c0_57], %119 {strides = array<i32>} : memref<8x8x128xf32, #tpu.memory_space<vmem>>, vector<1x8x128xf32>,
    %c4_i32 = arith.constant 4 : i32
    %c0_58 = arith.constant 0 : index
    %c0_59 = arith.constant 0 : index
    %120 = vector.load %arg6[%c0_58, %c0_59] : memref<8x128xf32, #tpu.memory_space<vmem>>, vector<8x128xf32>
    %c0_60 = arith.constant 0 : index
    %c0_61 = arith.constant 0 : index
    %121 = vector.load %arg7[%c0_60, %c0_61] : memref<8x128xf32, #tpu.memory_space<vmem>>, vector<8x128xf32>
    %122 = arith.index_cast %c4_i32 : i32 to index
    %c0_62 = arith.constant 0 : index
    %c0_63 = arith.constant 0 : index
    %123 = vector.load %arg1[%122, %c0_62, %c0_63] : memref<8x8x512xf32, #tpu.memory_space<vmem>>, vector<1x8x512xf32>
    %124 = vector.shape_cast %123 : vector<1x8x512xf32> to vector<8x512xf32>
    %cst_64 = arith.constant dense<0.000000e+00> : vector<8x512xf32>
    %125 = tpu.matmul %120, %3, %cst_64 {dimension_numbers = #tpu.dot_dimension_numbers<[1], [0], [0], [1], [0, 0, 1, 1], [], []>} : vector<8x128xf32>, vector<128x512xf32>, vector<8x512xf32> -> vector<8x512xf32>
    %126 = arith.addf %124, %125 : vector<8x512xf32>
    %127 = vector.extract_strided_slice %126 {offsets = [0, 0], sizes = [8, 384], strides = [1, 1]} : vector<8x512xf32> to vector<8x384xf32>
    %128 = arith.negf %127 : vector<8x384xf32>
    %129 = math.exp %128 : vector<8x384xf32>
    %cst_65 = arith.constant 1.000000e+00 : f32
    %130 = vector.broadcast %cst_65 : f32 to vector<8x384xf32>
    %131 = arith.addf %130, %129 : vector<8x384xf32>
    %132 = arith.divf %130, %131 : vector<8x384xf32>
    %133 = vector.extract_strided_slice %126 {offsets = [0, 384], sizes = [8, 128], strides = [1, 1]} : vector<8x512xf32> to vector<8x128xf32>
    %134 = math.tanh %133 : vector<8x128xf32>
    %135 = vector.extract_strided_slice %132 {offsets = [0, 0], sizes = [8, 128], strides = [1, 1]} : vector<8x384xf32> to vector<8x128xf32>
    %136 = vector.extract_strided_slice %132 {offsets = [0, 128], sizes = [8, 128], strides = [1, 1]} : vector<8x384xf32> to vector<8x128xf32>
    %137 = vector.extract_strided_slice %132 {offsets = [0, 256], sizes = [8, 128], strides = [1, 1]} : vector<8x384xf32> to vector<8x128xf32>
    %138 = arith.mulf %136, %121 : vector<8x128xf32>
    %139 = arith.mulf %135, %134 : vector<8x128xf32>
    %140 = arith.addf %138, %139 : vector<8x128xf32>
    %141 = math.tanh %140 : vector<8x128xf32>
    %142 = arith.mulf %137, %141 : vector<8x128xf32>
    %c0_66 = arith.constant 0 : index
    %c0_67 = arith.constant 0 : index
    %143 = vector.load %arg6[%c0_66, %c0_67] : memref<8x128xf32, #tpu.memory_space<vmem>>, vector<8x128xf32>
    tpu.vector_store %arg6[%c0_66, %c0_67], %142 {strides = array<i32>} : memref<8x128xf32, #tpu.memory_space<vmem>>, vector<8x128xf32>,
    %c0_68 = arith.constant 0 : index
    %c0_69 = arith.constant 0 : index
    %144 = vector.load %arg7[%c0_68, %c0_69] : memref<8x128xf32, #tpu.memory_space<vmem>>, vector<8x128xf32>
    tpu.vector_store %arg7[%c0_68, %c0_69], %140 {strides = array<i32>} : memref<8x128xf32, #tpu.memory_space<vmem>>, vector<8x128xf32>,
    %145 = arith.index_cast %c4_i32 : i32 to index
    %c0_70 = arith.constant 0 : index
    %c0_71 = arith.constant 0 : index
    %146 = vector.load %arg3[%145, %c0_70, %c0_71] : memref<8x8x128xf32, #tpu.memory_space<vmem>>, vector<1x8x128xf32>
    %147 = vector.shape_cast %146 : vector<1x8x128xf32> to vector<8x128xf32>
    %148 = vector.shape_cast %142 : vector<8x128xf32> to vector<1x8x128xf32>
    tpu.vector_store %arg3[%145, %c0_70, %c0_71], %148 {strides = array<i32>} : memref<8x8x128xf32, #tpu.memory_space<vmem>>, vector<1x8x128xf32>,
    %c5_i32 = arith.constant 5 : i32
    %c0_72 = arith.constant 0 : index
    %c0_73 = arith.constant 0 : index
    %149 = vector.load %arg6[%c0_72, %c0_73] : memref<8x128xf32, #tpu.memory_space<vmem>>, vector<8x128xf32>
    %c0_74 = arith.constant 0 : index
    %c0_75 = arith.constant 0 : index
    %150 = vector.load %arg7[%c0_74, %c0_75] : memref<8x128xf32, #tpu.memory_space<vmem>>, vector<8x128xf32>
    %151 = arith.index_cast %c5_i32 : i32 to index
    %c0_76 = arith.constant 0 : index
    %c0_77 = arith.constant 0 : index
    %152 = vector.load %arg1[%151, %c0_76, %c0_77] : memref<8x8x512xf32, #tpu.memory_space<vmem>>, vector<1x8x512xf32>
    %153 = vector.shape_cast %152 : vector<1x8x512xf32> to vector<8x512xf32>
    %cst_78 = arith.constant dense<0.000000e+00> : vector<8x512xf32>
    %154 = tpu.matmul %149, %3, %cst_78 {dimension_numbers = #tpu.dot_dimension_numbers<[1], [0], [0], [1], [0, 0, 1, 1], [], []>} : vector<8x128xf32>, vector<128x512xf32>, vector<8x512xf32> -> vector<8x512xf32>
    %155 = arith.addf %153, %154 : vector<8x512xf32>
    %156 = vector.extract_strided_slice %155 {offsets = [0, 0], sizes = [8, 384], strides = [1, 1]} : vector<8x512xf32> to vector<8x384xf32>
    %157 = arith.negf %156 : vector<8x384xf32>
    %158 = math.exp %157 : vector<8x384xf32>
    %cst_79 = arith.constant 1.000000e+00 : f32
    %159 = vector.broadcast %cst_79 : f32 to vector<8x384xf32>
    %160 = arith.addf %159, %158 : vector<8x384xf32>
    %161 = arith.divf %159, %160 : vector<8x384xf32>
    %162 = vector.extract_strided_slice %155 {offsets = [0, 384], sizes = [8, 128], strides = [1, 1]} : vector<8x512xf32> to vector<8x128xf32>
    %163 = math.tanh %162 : vector<8x128xf32>
    %164 = vector.extract_strided_slice %161 {offsets = [0, 0], sizes = [8, 128], strides = [1, 1]} : vector<8x384xf32> to vector<8x128xf32>
    %165 = vector.extract_strided_slice %161 {offsets = [0, 128], sizes = [8, 128], strides = [1, 1]} : vector<8x384xf32> to vector<8x128xf32>
    %166 = vector.extract_strided_slice %161 {offsets = [0, 256], sizes = [8, 128], strides = [1, 1]} : vector<8x384xf32> to vector<8x128xf32>
    %167 = arith.mulf %165, %150 : vector<8x128xf32>
    %168 = arith.mulf %164, %163 : vector<8x128xf32>
    %169 = arith.addf %167, %168 : vector<8x128xf32>
    %170 = math.tanh %169 : vector<8x128xf32>
    %171 = arith.mulf %166, %170 : vector<8x128xf32>
    %c0_80 = arith.constant 0 : index
    %c0_81 = arith.constant 0 : index
    %172 = vector.load %arg6[%c0_80, %c0_81] : memref<8x128xf32, #tpu.memory_space<vmem>>, vector<8x128xf32>
    tpu.vector_store %arg6[%c0_80, %c0_81], %171 {strides = array<i32>} : memref<8x128xf32, #tpu.memory_space<vmem>>, vector<8x128xf32>,
    %c0_82 = arith.constant 0 : index
    %c0_83 = arith.constant 0 : index
    %173 = vector.load %arg7[%c0_82, %c0_83] : memref<8x128xf32, #tpu.memory_space<vmem>>, vector<8x128xf32>
    tpu.vector_store %arg7[%c0_82, %c0_83], %169 {strides = array<i32>} : memref<8x128xf32, #tpu.memory_space<vmem>>, vector<8x128xf32>,
    %174 = arith.index_cast %c5_i32 : i32 to index
    %c0_84 = arith.constant 0 : index
    %c0_85 = arith.constant 0 : index
    %175 = vector.load %arg3[%174, %c0_84, %c0_85] : memref<8x8x128xf32, #tpu.memory_space<vmem>>, vector<1x8x128xf32>
    %176 = vector.shape_cast %175 : vector<1x8x128xf32> to vector<8x128xf32>
    %177 = vector.shape_cast %171 : vector<8x128xf32> to vector<1x8x128xf32>
    tpu.vector_store %arg3[%174, %c0_84, %c0_85], %177 {strides = array<i32>} : memref<8x8x128xf32, #tpu.memory_space<vmem>>, vector<1x8x128xf32>,
    %c6_i32 = arith.constant 6 : i32
    %c0_86 = arith.constant 0 : index
    %c0_87 = arith.constant 0 : index
    %178 = vector.load %arg6[%c0_86, %c0_87] : memref<8x128xf32, #tpu.memory_space<vmem>>, vector<8x128xf32>
    %c0_88 = arith.constant 0 : index
    %c0_89 = arith.constant 0 : index
    %179 = vector.load %arg7[%c0_88, %c0_89] : memref<8x128xf32, #tpu.memory_space<vmem>>, vector<8x128xf32>
    %180 = arith.index_cast %c6_i32 : i32 to index
    %c0_90 = arith.constant 0 : index
    %c0_91 = arith.constant 0 : index
    %181 = vector.load %arg1[%180, %c0_90, %c0_91] : memref<8x8x512xf32, #tpu.memory_space<vmem>>, vector<1x8x512xf32>
    %182 = vector.shape_cast %181 : vector<1x8x512xf32> to vector<8x512xf32>
    %cst_92 = arith.constant dense<0.000000e+00> : vector<8x512xf32>
    %183 = tpu.matmul %178, %3, %cst_92 {dimension_numbers = #tpu.dot_dimension_numbers<[1], [0], [0], [1], [0, 0, 1, 1], [], []>} : vector<8x128xf32>, vector<128x512xf32>, vector<8x512xf32> -> vector<8x512xf32>
    %184 = arith.addf %182, %183 : vector<8x512xf32>
    %185 = vector.extract_strided_slice %184 {offsets = [0, 0], sizes = [8, 384], strides = [1, 1]} : vector<8x512xf32> to vector<8x384xf32>
    %186 = arith.negf %185 : vector<8x384xf32>
    %187 = math.exp %186 : vector<8x384xf32>
    %cst_93 = arith.constant 1.000000e+00 : f32
    %188 = vector.broadcast %cst_93 : f32 to vector<8x384xf32>
    %189 = arith.addf %188, %187 : vector<8x384xf32>
    %190 = arith.divf %188, %189 : vector<8x384xf32>
    %191 = vector.extract_strided_slice %184 {offsets = [0, 384], sizes = [8, 128], strides = [1, 1]} : vector<8x512xf32> to vector<8x128xf32>
    %192 = math.tanh %191 : vector<8x128xf32>
    %193 = vector.extract_strided_slice %190 {offsets = [0, 0], sizes = [8, 128], strides = [1, 1]} : vector<8x384xf32> to vector<8x128xf32>
    %194 = vector.extract_strided_slice %190 {offsets = [0, 128], sizes = [8, 128], strides = [1, 1]} : vector<8x384xf32> to vector<8x128xf32>
    %195 = vector.extract_strided_slice %190 {offsets = [0, 256], sizes = [8, 128], strides = [1, 1]} : vector<8x384xf32> to vector<8x128xf32>
    %196 = arith.mulf %194, %179 : vector<8x128xf32>
    %197 = arith.mulf %193, %192 : vector<8x128xf32>
    %198 = arith.addf %196, %197 : vector<8x128xf32>
    %199 = math.tanh %198 : vector<8x128xf32>
    %200 = arith.mulf %195, %199 : vector<8x128xf32>
    %c0_94 = arith.constant 0 : index
    %c0_95 = arith.constant 0 : index
    %201 = vector.load %arg6[%c0_94, %c0_95] : memref<8x128xf32, #tpu.memory_space<vmem>>, vector<8x128xf32>
    tpu.vector_store %arg6[%c0_94, %c0_95], %200 {strides = array<i32>} : memref<8x128xf32, #tpu.memory_space<vmem>>, vector<8x128xf32>,
    %c0_96 = arith.constant 0 : index
    %c0_97 = arith.constant 0 : index
    %202 = vector.load %arg7[%c0_96, %c0_97] : memref<8x128xf32, #tpu.memory_space<vmem>>, vector<8x128xf32>
    tpu.vector_store %arg7[%c0_96, %c0_97], %198 {strides = array<i32>} : memref<8x128xf32, #tpu.memory_space<vmem>>, vector<8x128xf32>,
    %203 = arith.index_cast %c6_i32 : i32 to index
    %c0_98 = arith.constant 0 : index
    %c0_99 = arith.constant 0 : index
    %204 = vector.load %arg3[%203, %c0_98, %c0_99] : memref<8x8x128xf32, #tpu.memory_space<vmem>>, vector<1x8x128xf32>
    %205 = vector.shape_cast %204 : vector<1x8x128xf32> to vector<8x128xf32>
    %206 = vector.shape_cast %200 : vector<8x128xf32> to vector<1x8x128xf32>
    tpu.vector_store %arg3[%203, %c0_98, %c0_99], %206 {strides = array<i32>} : memref<8x8x128xf32, #tpu.memory_space<vmem>>, vector<1x8x128xf32>,
    %c7_i32 = arith.constant 7 : i32
    %c0_100 = arith.constant 0 : index
    %c0_101 = arith.constant 0 : index
    %207 = vector.load %arg6[%c0_100, %c0_101] : memref<8x128xf32, #tpu.memory_space<vmem>>, vector<8x128xf32>
    %c0_102 = arith.constant 0 : index
    %c0_103 = arith.constant 0 : index
    %208 = vector.load %arg7[%c0_102, %c0_103] : memref<8x128xf32, #tpu.memory_space<vmem>>, vector<8x128xf32>
    %209 = arith.index_cast %c7_i32 : i32 to index
    %c0_104 = arith.constant 0 : index
    %c0_105 = arith.constant 0 : index
    %210 = vector.load %arg1[%209, %c0_104, %c0_105] : memref<8x8x512xf32, #tpu.memory_space<vmem>>, vector<1x8x512xf32>
    %211 = vector.shape_cast %210 : vector<1x8x512xf32> to vector<8x512xf32>
    %cst_106 = arith.constant dense<0.000000e+00> : vector<8x512xf32>
    %212 = tpu.matmul %207, %3, %cst_106 {dimension_numbers = #tpu.dot_dimension_numbers<[1], [0], [0], [1], [0, 0, 1, 1], [], []>} : vector<8x128xf32>, vector<128x512xf32>, vector<8x512xf32> -> vector<8x512xf32>
    %213 = arith.addf %211, %212 : vector<8x512xf32>
    %214 = vector.extract_strided_slice %213 {offsets = [0, 0], sizes = [8, 384], strides = [1, 1]} : vector<8x512xf32> to vector<8x384xf32>
    %215 = arith.negf %214 : vector<8x384xf32>
    %216 = math.exp %215 : vector<8x384xf32>
    %cst_107 = arith.constant 1.000000e+00 : f32
    %217 = vector.broadcast %cst_107 : f32 to vector<8x384xf32>
    %218 = arith.addf %217, %216 : vector<8x384xf32>
    %219 = arith.divf %217, %218 : vector<8x384xf32>
    %220 = vector.extract_strided_slice %213 {offsets = [0, 384], sizes = [8, 128], strides = [1, 1]} : vector<8x512xf32> to vector<8x128xf32>
    %221 = math.tanh %220 : vector<8x128xf32>
    %222 = vector.extract_strided_slice %219 {offsets = [0, 0], sizes = [8, 128], strides = [1, 1]} : vector<8x384xf32> to vector<8x128xf32>
    %223 = vector.extract_strided_slice %219 {offsets = [0, 128], sizes = [8, 128], strides = [1, 1]} : vector<8x384xf32> to vector<8x128xf32>
    %224 = vector.extract_strided_slice %219 {offsets = [0, 256], sizes = [8, 128], strides = [1, 1]} : vector<8x384xf32> to vector<8x128xf32>
    %225 = arith.mulf %223, %208 : vector<8x128xf32>
    %226 = arith.mulf %222, %221 : vector<8x128xf32>
    %227 = arith.addf %225, %226 : vector<8x128xf32>
    %228 = math.tanh %227 : vector<8x128xf32>
    %229 = arith.mulf %224, %228 : vector<8x128xf32>
    %c0_108 = arith.constant 0 : index
    %c0_109 = arith.constant 0 : index
    %230 = vector.load %arg6[%c0_108, %c0_109] : memref<8x128xf32, #tpu.memory_space<vmem>>, vector<8x128xf32>
    tpu.vector_store %arg6[%c0_108, %c0_109], %229 {strides = array<i32>} : memref<8x128xf32, #tpu.memory_space<vmem>>, vector<8x128xf32>,
    %c0_110 = arith.constant 0 : index
    %c0_111 = arith.constant 0 : index
    %231 = vector.load %arg7[%c0_110, %c0_111] : memref<8x128xf32, #tpu.memory_space<vmem>>, vector<8x128xf32>
    tpu.vector_store %arg7[%c0_110, %c0_111], %227 {strides = array<i32>} : memref<8x128xf32, #tpu.memory_space<vmem>>, vector<8x128xf32>,
    %232 = arith.index_cast %c7_i32 : i32 to index
    %c0_112 = arith.constant 0 : index
    %c0_113 = arith.constant 0 : index
    %233 = vector.load %arg3[%232, %c0_112, %c0_113] : memref<8x8x128xf32, #tpu.memory_space<vmem>>, vector<1x8x128xf32>
    %234 = vector.shape_cast %233 : vector<1x8x128xf32> to vector<8x128xf32>
    %235 = vector.shape_cast %229 : vector<8x128xf32> to vector<1x8x128xf32>
    tpu.vector_store %arg3[%232, %c0_112, %c0_113], %235 {strides = array<i32>} : memref<8x8x128xf32, #tpu.memory_space<vmem>>, vector<1x8x128xf32>,
    %c8_i32 = arith.constant 8 : i32
    %c0_i32_114 = arith.constant 0 : i32
    %236 = arith.cmpi eq, %arg0, %c0_i32_114 : i32
    %237 = arith.extui %236 : i1 to i32
    %c0_i32_115 = arith.constant 0 : i32
    %238 = arith.cmpi ne, %237, %c0_i32_115 : i32
    scf.if %238 {
      %c0_116 = arith.constant 0 : index
      %c0_117 = arith.constant 0 : index
      %239 = vector.load %arg6[%c0_116, %c0_117] : memref<8x128xf32, #tpu.memory_space<vmem>>, vector<8x128xf32>
      %c0_118 = arith.constant 0 : index
      %c0_119 = arith.constant 0 : index
      %240 = vector.load %arg4[%c0_118, %c0_119] : memref<8x128xf32, #tpu.memory_space<vmem>>, vector<8x128xf32>
      tpu.vector_store %arg4[%c0_118, %c0_119], %239 {strides = array<i32>} : memref<8x128xf32, #tpu.memory_space<vmem>>, vector<8x128xf32>,
      %c0_120 = arith.constant 0 : index
      %c0_121 = arith.constant 0 : index
      %241 = vector.load %arg7[%c0_120, %c0_121] : memref<8x128xf32, #tpu.memory_space<vmem>>, vector<8x128xf32>
      %c0_122 = arith.constant 0 : index
      %c0_123 = arith.constant 0 : index
      %242 = vector.load %arg5[%c0_122, %c0_123] : memref<8x128xf32, #tpu.memory_space<vmem>>, vector<8x128xf32>
      tpu.vector_store %arg5[%c0_122, %c0_123], %241 {strides = array<i32>} : memref<8x128xf32, #tpu.memory_space<vmem>>, vector<8x128xf32>,
    } else {
    }
    return
  }
  func.func @transform_0(%arg0: i32) -> (i32, i32, i32) {
    %c0_i32 = arith.constant 0 : i32
    %c0_i32_0 = arith.constant 0 : i32
    %c0_i32_1 = arith.constant 0 : i32
    return %arg0, %c0_i32, %c0_i32_0 : i32, i32, i32
  }
  func.func @transform_1(%arg0: i32) -> (i32, i32) {
    %c0_i32 = arith.constant 0 : i32
    %c0_i32_0 = arith.constant 0 : i32
    %c0_i32_1 = arith.constant 0 : i32
    return %c0_i32, %c0_i32_0 : i32, i32
  }
  func.func @transform_2(%arg0: i32) -> (i32, i32, i32) {
    %c0_i32 = arith.constant 0 : i32
    %c0_i32_0 = arith.constant 0 : i32
    %c0_i32_1 = arith.constant 0 : i32
    return %arg0, %c0_i32, %c0_i32_0 : i32, i32, i32
  }
  func.func @transform_3(%arg0: i32) -> (i32, i32) {
    %c0_i32 = arith.constant 0 : i32
    %c0_i32_0 = arith.constant 0 : i32
    %c0_i32_1 = arith.constant 0 : i32
    return %c0_i32, %c0_i32_0 : i32, i32
  }
  func.func @transform_4(%arg0: i32) -> (i32, i32) {
    %c0_i32 = arith.constant 0 : i32
    %c0_i32_0 = arith.constant 0 : i32
    %c0_i32_1 = arith.constant 0 : i32
    return %c0_i32, %c0_i32_0 : i32, i32
  }
}

</mosaic_0001>

<llo_original>
// kernel: encoder_forward.2
$region0: #{encoder_forward.2}
  #allocation0 [shape = 'u32[]', space=smem, size = 0x4, offset = 0x4, fixed_abs, tag = 'smem constant byte address 0x4 - core index']
  #allocation1 [shape = 'u32[72,128]{1,0:T(1,128)}', space=vmem, size = 0x9000, scoped, tag = 'internal scratch']
  #allocation2 [shape = 'f32[8,128]{1,0:T(8,128)}', space=vmem, size = 0x1000, scoped, tag = 'scratch operand']
  #allocation3 [shape = 'f32[8,128]{1,0:T(8,128)}', space=vmem, size = 0x1000, scoped, tag = 'scratch operand']
  %s0 = inlined_call_operand.vmem [shape: f32[8,8,512], index: 0, kind: input, shape index: {}]
  %s1 = inlined_call_operand.vmem [shape: f32[128,512], index: 1, kind: input, shape index: {}]
  %s2 = inlined_call_operand.vmem [shape: f32[8,8,128], index: 2, kind: output, shape index: {0}]
  %s3 = inlined_call_operand.vmem [shape: f32[8,128], index: 3, kind: output, shape index: {1}]
  %s4 = inlined_call_operand.vmem [shape: f32[8,128], index: 4, kind: output, shape index: {2}]
  %5 = xla_tuple %s2, %s3, %s4
  %s6 = sld [smem:[#allocation0]]
  $region42: #{encoder_forward.2} parent=0
    _
  %s8 = ssub.s32 1, %s6
  %s9 = scalar_select 0, %s8, %s6
  // Predicated region
  $region2: #{encoder_forward.2} parent=0 // pred_check
    _
  $region3: #{encoder_forward.2} parent=0 // pred_check_branch
    %11 = sbr.rel (0) target = $region5
  $region4: #{encoder_forward.2} parent=0 // pred_region
    _
  $region5: #{encoder_forward.2} parent=0 // pred_fallthru
    _
  // Predicated region
  $region6: #{encoder_forward.2} parent=0 // pred_check
    _
  $region7: #{encoder_forward.2} parent=0 // pred_check_branch
    %13 = sbr.rel (0) target = $region9
  $region8: #{encoder_forward.2} parent=0 // pred_region
    _
  $region9: #{encoder_forward.2} parent=0 // pred_fallthru
    _
  %p14 = scmp.eq.s32.totalorder 0, 0
  // Predicated region
  $region10: #{encoder_forward.2} parent=0 // pred_check
    %p15 = pneg %p14
  $region11: #{encoder_forward.2} parent=0 // pred_check_branch
    %17 = sbr.rel (%p15) target = $region13
  $region12: #{encoder_forward.2} parent=0 // pred_region
    %18 = vst [vmem:[#allocation2] sm:$0xff] 0.0
    %19 = vst [vmem:[#allocation3] sm:$0xff] 0.0
  $region13: #{encoder_forward.2} parent=0 // pred_fallthru
    _
  %v20 = vld [vmem:[%s1] sm:$0xff]
  %v21 = vld [vmem:[%s1 + $0x8] sm:$0xff]
  %v22 = vld [vmem:[%s1 + $0x10] sm:$0xff]
  %v23 = vld [vmem:[%s1 + $0x18] sm:$0xff]
  %v24 = vld [vmem:[%s1 + $0x20] sm:$0xff]
  %v25 = vld [vmem:[%s1 + $0x28] sm:$0xff]
  %v26 = vld [vmem:[%s1 + $0x30] sm:$0xff]
  %v27 = vld [vmem:[%s1 + $0x38] sm:$0xff]
  %v28 = vld [vmem:[%s1 + $0x40] sm:$0xff]
  %v29 = vld [vmem:[%s1 + $0x48] sm:$0xff]
  %v30 = vld [vmem:[%s1 + $0x50] sm:$0xff]
  %v31 = vld [vmem:[%s1 + $0x58] sm:$0xff]
  %v32 = vld [vmem:[%s1 + $0x60] sm:$0xff]
  %v33 = vld [vmem:[%s1 + $0x68] sm:$0xff]
  %v34 = vld [vmem:[%s1 + $0x70] sm:$0xff]
  %v35 = vld [vmem:[%s1 + $0x78] sm:$0xff]
  %v36 = vld [vmem:[%s1 + $0x80] sm:$0xff]
  %v37 = vld [vmem:[%s1 + $0x88] sm:$0xff]
  %v38 = vld [vmem:[%s1 + $0x90] sm:$0xff]
  %v39 = vld [vmem:[%s1 + $0x98] sm:$0xff]
  %v40 = vld [vmem:[%s1 + $0xa0] sm:$0xff]
  %v41 = vld [vmem:[%s1 + $0xa8] sm:$0xff]
  %v42 = vld [vmem:[%s1 + $0xb0] sm:$0xff]
  %v43 = vld [vmem:[%s1 + $0xb8] sm:$0xff]
  %v44 = vld [vmem:[%s1 + $0xc0] sm:$0xff]
  %v45 = vld [vmem:[%s1 + $0xc8] sm:$0xff]
  %v46 = vld [vmem:[%s1 + $0xd0] sm:$0xff]
  %v47 = vld [vmem:[%s1 + $0xd8] sm:$0xff]
  %v48 = vld [vmem:[%s1 + $0xe0] sm:$0xff]
  %v49 = vld [vmem:[%s1 + $0xe8] sm:$0xff]
  %v50 = vld [vmem:[%s1 + $0xf0] sm:$0xff]
  %v51 = vld [vmem:[%s1 + $0xf8] sm:$0xff]
  %v52 = vld [vmem:[%s1 + $0x100] sm:$0xff]
  %v53 = vld [vmem:[%s1 + $0x108] sm:$0xff]
  %v54 = vld [vmem:[%s1 + $0x110] sm:$0xff]
  %v55 = vld [vmem:[%s1 + $0x118] sm:$0xff]
  %v56 = vld [vmem:[%s1 + $0x120] sm:$0xff]
  %v57 = vld [vmem:[%s1 + $0x128] sm:$0xff]
  %v58 = vld [vmem:[%s1 + $0x130] sm:$0xff]
  %v59 = vld [vmem:[%s1 + $0x138] sm:$0xff]
  %v60 = vld [vmem:[%s1 + $0x140] sm:$0xff]
  %v61 = vld [vmem:[%s1 + $0x148] sm:$0xff]
  %v62 = vld [vmem:[%s1 + $0x150] sm:$0xff]
  %v63 = vld [vmem:[%s1 + $0x158] sm:$0xff]
  %v64 = vld [vmem:[%s1 + $0x160] sm:$0xff]
  %v65 = vld [vmem:[%s1 + $0x168] sm:$0xff]
  %v66 = vld [vmem:[%s1 + $0x170] sm:$0xff]
  %v67 = vld [vmem:[%s1 + $0x178] sm:$0xff]
  %v68 = vld [vmem:[%s1 + $0x180] sm:$0xff]
  %v69 = vld [vmem:[%s1 + $0x188] sm:$0xff]
  %v70 = vld [vmem:[%s1 + $0x190] sm:$0xff]
  %v71 = vld [vmem:[%s1 + $0x198] sm:$0xff]
  %v72 = vld [vmem:[%s1 + $0x1a0] sm:$0xff]
  %v73 = vld [vmem:[%s1 + $0x1a8] sm:$0xff]
  %v74 = vld [vmem:[%s1 + $0x1b0] sm:$0xff]
  %v75 = vld [vmem:[%s1 + $0x1b8] sm:$0xff]
  %v76 = vld [vmem:[%s1 + $0x1c0] sm:$0xff]
  %v77 = vld [vmem:[%s1 + $0x1c8] sm:$0xff]
  %v78 = vld [vmem:[%s1 + $0x1d0] sm:$0xff]
  %v79 = vld [vmem:[%s1 + $0x1d8] sm:$0xff]
  %v80 = vld [vmem:[%s1 + $0x1e0] sm:$0xff]
  %v81 = vld [vmem:[%s1 + $0x1e8] sm:$0xff]
  %v82 = vld [vmem:[%s1 + $0x1f0] sm:$0xff]
  %v83 = vld [vmem:[%s1 + $0x1f8] sm:$0xff]
  %v84 = vld [vmem:[#allocation2] sm:$0xff]
  %v85 = vld [vmem:[#allocation3] sm:$0xff]
  %v86 = vld [vmem:[%s0] sm:$0xff]
  %v87 = vld [vmem:[%s0 + $0x8] sm:$0xff]
  %v88 = vld [vmem:[%s0 + $0x10] sm:$0xff]
  %v89 = vld [vmem:[%s0 + $0x18] sm:$0xff]
  %90 = vmatpush.msra.mxu0 %v80
  %91 = vmatpush.msra.mxu0 %v76
  %92 = vmatpush.msra.mxu0 %v72
  %93 = vmatpush.msra.mxu0 %v68
  %94 = vmatpush.msra.mxu0 %v64
  %95 = vmatpush.msra.mxu0 %v60
  %96 = vmatpush.msra.mxu0 %v56
  %97 = vmatpush.msra.mxu0 %v52
  %98 = vmatpush.msra.mxu0 %v48
  %99 = vmatpush.msra.mxu0 %v44
  %100 = vmatpush.msra.mxu0 %v40
  %101 = vmatpush.msra.mxu0 %v36
  %102 = vmatpush.msra.mxu0 %v32
  %103 = vmatpush.msra.mxu0 %v28
  %104 = vmatpush.msra.mxu0 %v24
  %105 = vmatpush.msra.mxu0 %v20
  %106 = vmatmul.f32.gmra.mxu0 %v84
  %v107 = vpop.f32.mrf.mxu0
  %v108 = vadd.f32 0.0, %v107
  %109 = vdwg.mxu0
  %110 = vmatpush.msra.mxu0 %v81
  %111 = vmatpush.msra.mxu0 %v77
  %112 = vmatpush.msra.mxu0 %v73
  %113 = vmatpush.msra.mxu0 %v69
  %114 = vmatpush.msra.mxu0 %v65
  %115 = vmatpush.msra.mxu0 %v61
  %116 = vmatpush.msra.mxu0 %v57
  %117 = vmatpush.msra.mxu0 %v53
  %118 = vmatpush.msra.mxu0 %v49
  %119 = vmatpush.msra.mxu0 %v45
  %120 = vmatpush.msra.mxu0 %v41
  %121 = vmatpush.msra.mxu0 %v37
  %122 = vmatpush.msra.mxu0 %v33
  %123 = vmatpush.msra.mxu0 %v29
  %124 = vmatpush.msra.mxu0 %v25
  %125 = vmatpush.msra.mxu0 %v21
  %126 = vmatmul.f32.gmra.mxu0 %v84
  %v127 = vpop.f32.mrf.mxu0
  %v128 = vadd.f32 0.0, %v127
  %129 = vdwg.mxu0
  %130 = vmatpush.msra.mxu0 %v82
  %131 = vmatpush.msra.mxu0 %v78
  %132 = vmatpush.msra.mxu0 %v74
  %133 = vmatpush.msra.mxu0 %v70
  %134 = vmatpush.msra.mxu0 %v66
  %135 = vmatpush.msra.mxu0 %v62
  %136 = vmatpush.msra.mxu0 %v58
  %137 = vmatpush.msra.mxu0 %v54
  %138 = vmatpush.msra.mxu0 %v50
  %139 = vmatpush.msra.mxu0 %v46
  %140 = vmatpush.msra.mxu0 %v42
  %141 = vmatpush.msra.mxu0 %v38
  %142 = vmatpush.msra.mxu0 %v34
  %143 = vmatpush.msra.mxu0 %v30
  %144 = vmatpush.msra.mxu0 %v26
  %145 = vmatpush.msra.mxu0 %v22
  %146 = vmatmul.f32.gmra.mxu0 %v84
  %v147 = vpop.f32.mrf.mxu0
  %v148 = vadd.f32 0.0, %v147
  %149 = vdwg.mxu0
  %150 = vmatpush.msra.mxu0 %v83
  %151 = vmatpush.msra.mxu0 %v79
  %152 = vmatpush.msra.mxu0 %v75
  %153 = vmatpush.msra.mxu0 %v71
  %154 = vmatpush.msra.mxu0 %v67
  %155 = vmatpush.msra.mxu0 %v63
  %156 = vmatpush.msra.mxu0 %v59
  %157 = vmatpush.msra.mxu0 %v55
  %158 = vmatpush.msra.mxu0 %v51
  %159 = vmatpush.msra.mxu0 %v47
  %160 = vmatpush.msra.mxu0 %v43
  %161 = vmatpush.msra.mxu0 %v39
  %162 = vmatpush.msra.mxu0 %v35
  %163 = vmatpush.msra.mxu0 %v31
  %164 = vmatpush.msra.mxu0 %v27
  %165 = vmatpush.msra.mxu0 %v23
  %166 = vmatmul.f32.gmra.mxu0 %v84
  %v167 = vpop.f32.mrf.mxu0
  %v168 = vadd.f32 0.0, %v167
  %169 = vdwg.mxu0
  %v170 = vadd.f32 %v86, %v108
  %v171 = vadd.f32 %v87, %v128
  %v172 = vadd.f32 %v88, %v148
  %v173 = vadd.f32 %v89, %v168
  %v174 = vxor.u32 %v170, 2147483648
  %v175 = vxor.u32 %v171, 2147483648
  %v176 = vxor.u32 %v172, 2147483648
  %v177 = vmul.f32 %v174, 1.442695
  %v178 = vpow.pop %v177
  %v179 = vmul.f32 %v175, 1.442695
  %v180 = vpow.pop %v179
  %v181 = vmul.f32 %v176, 1.442695
  %v182 = vpow.pop %v181
  %v183 = vadd.f32 %v178, 1.0
  %v184 = vadd.f32 %v180, 1.0
  %v185 = vadd.f32 %v182, 1.0
  %v186 = vrcp.pop %v183
  %v187 = vmul.f32 %v183, %v186
  %v188 = vsub.f32 1.0, %v187
  %v189 = vmul.f32 %v186, %v188
  %v190 = vadd.f32 %v186, %v189
  %vm191 = vweird.f32 %v183
  %vm192 = vweird.f32 %v186
  %vm193 = vmor %vm191, %vm192
  %v194 = vsel %vm193, %v186, %v190
  %v195 = vand.u32 2147483647, %v183
  %vm196 = vcmp.eq.f32.partialorder %v195, 8.507059e+37
  %v197 = vand.u32 %v183, 2147483648
  %v198 = vor.u32 1.1754944e-38, %v197
  %v199 = vsel %vm196, %v198, %v194
  %v200 = vmul.f32 1.0, %v199
  %v201 = vrcp.pop %v184
  %v202 = vmul.f32 %v184, %v201
  %v203 = vsub.f32 1.0, %v202
  %v204 = vmul.f32 %v201, %v203
  %v205 = vadd.f32 %v201, %v204
  %vm206 = vweird.f32 %v184
  %vm207 = vweird.f32 %v201
  %vm208 = vmor %vm206, %vm207
  %v209 = vsel %vm208, %v201, %v205
  %v210 = vand.u32 2147483647, %v184
  %vm211 = vcmp.eq.f32.partialorder %v210, 8.507059e+37
  %v212 = vand.u32 %v184, 2147483648
  %v213 = vor.u32 1.1754944e-38, %v212
  %v214 = vsel %vm211, %v213, %v209
  %v215 = vmul.f32 1.0, %v214
  %v216 = vrcp.pop %v185
  %v217 = vmul.f32 %v185, %v216
  %v218 = vsub.f32 1.0, %v217
  %v219 = vmul.f32 %v216, %v218
  %v220 = vadd.f32 %v216, %v219
  %vm221 = vweird.f32 %v185
  %vm222 = vweird.f32 %v216
  %vm223 = vmor %vm221, %vm222
  %v224 = vsel %vm223, %v216, %v220
  %v225 = vand.u32 2147483647, %v185
  %vm226 = vcmp.eq.f32.partialorder %v225, 8.507059e+37
  %v227 = vand.u32 %v185, 2147483648
  %v228 = vor.u32 1.1754944e-38, %v227
  %v229 = vsel %vm226, %v228, %v224
  %v230 = vmul.f32 1.0, %v229
  %v231 = vtanh.pop %v173
  %v232 = vmul.f32 %v215, %v85
  %v233 = vmul.f32 %v200, %v231
  %v234 = vadd.f32 %v232, %v233
  %v235 = vtanh.pop %v234
  %v236 = vmul.f32 %v230, %v235
  %237 = vst [vmem:[#allocation2] sm:$0xff] %v236
  %238 = vst [vmem:[#allocation3] sm:$0xff] %v234
  %239 = vst [vmem:[%s2] sm:$0xff] %v236
  %v240 = vld [vmem:[#allocation2] sm:$0xff]
  %v241 = vld [vmem:[#allocation3] sm:$0xff]
  %s242 = scalar_lea.vmem %s0, 32
  %v243 = vld [vmem:[%s242] sm:$0xff]
  %v244 = vld [vmem:[%s242 + $0x8] sm:$0xff]
  %v245 = vld [vmem:[%s242 + $0x10] sm:$0xff]
  %v246 = vld [vmem:[%s242 + $0x18] sm:$0xff]
  %247 = vmatpush.msra.mxu0 %v80
  %248 = vmatpush.msra.mxu0 %v76
  %249 = vmatpush.msra.mxu0 %v72
  %250 = vmatpush.msra.mxu0 %v68
  %251 = vmatpush.msra.mxu0 %v64
  %252 = vmatpush.msra.mxu0 %v60
  %253 = vmatpush.msra.mxu0 %v56
  %254 = vmatpush.msra.mxu0 %v52
  %255 = vmatpush.msra.mxu0 %v48
  %256 = vmatpush.msra.mxu0 %v44
  %257 = vmatpush.msra.mxu0 %v40
  %258 = vmatpush.msra.mxu0 %v36
  %259 = vmatpush.msra.mxu0 %v32
  %260 = vmatpush.msra.mxu0 %v28
  %261 = vmatpush.msra.mxu0 %v24
  %262 = vmatpush.msra.mxu0 %v20
  %263 = vmatmul.f32.gmra.mxu0 %v240
  %v264 = vpop.f32.mrf.mxu0
  %v265 = vadd.f32 0.0, %v264
  %266 = vdwg.mxu0
  %267 = vmatpush.msra.mxu0 %v81
  %268 = vmatpush.msra.mxu0 %v77
  %269 = vmatpush.msra.mxu0 %v73
  %270 = vmatpush.msra.mxu0 %v69
  %271 = vmatpush.msra.mxu0 %v65
  %272 = vmatpush.msra.mxu0 %v61
  %273 = vmatpush.msra.mxu0 %v57
  %274 = vmatpush.msra.mxu0 %v53
  %275 = vmatpush.msra.mxu0 %v49
  %276 = vmatpush.msra.mxu0 %v45
  %277 = vmatpush.msra.mxu0 %v41
  %278 = vmatpush.msra.mxu0 %v37
  %279 = vmatpush.msra.mxu0 %v33
  %280 = vmatpush.msra.mxu0 %v29
  %281 = vmatpush.msra.mxu0 %v25
  %282 = vmatpush.msra.mxu0 %v21
  %283 = vmatmul.f32.gmra.mxu0 %v240
  %v284 = vpop.f32.mrf.mxu0
  %v285 = vadd.f32 0.0, %v284
  %286 = vdwg.mxu0
  %287 = vmatpush.msra.mxu0 %v82
  %288 = vmatpush.msra.mxu0 %v78
  %289 = vmatpush.msra.mxu0 %v74
  %290 = vmatpush.msra.mxu0 %v70
  %291 = vmatpush.msra.mxu0 %v66
  %292 = vmatpush.msra.mxu0 %v62
  %293 = vmatpush.msra.mxu0 %v58
  %294 = vmatpush.msra.mxu0 %v54
  %295 = vmatpush.msra.mxu0 %v50
  %296 = vmatpush.msra.mxu0 %v46
  %297 = vmatpush.msra.mxu0 %v42
  %298 = vmatpush.msra.mxu0 %v38
  %299 = vmatpush.msra.mxu0 %v34
  %300 = vmatpush.msra.mxu0 %v30
  %301 = vmatpush.msra.mxu0 %v26
  %302 = vmatpush.msra.mxu0 %v22
  %303 = vmatmul.f32.gmra.mxu0 %v240
  %v304 = vpop.f32.mrf.mxu0
  %v305 = vadd.f32 0.0, %v304
  %306 = vdwg.mxu0
  %307 = vmatpush.msra.mxu0 %v83
  %308 = vmatpush.msra.mxu0 %v79
  %309 = vmatpush.msra.mxu0 %v75
  %310 = vmatpush.msra.mxu0 %v71
  %311 = vmatpush.msra.mxu0 %v67
  %312 = vmatpush.msra.mxu0 %v63
  %313 = vmatpush.msra.mxu0 %v59
  %314 = vmatpush.msra.mxu0 %v55
  %315 = vmatpush.msra.mxu0 %v51
  %316 = vmatpush.msra.mxu0 %v47
  %317 = vmatpush.msra.mxu0 %v43
  %318 = vmatpush.msra.mxu0 %v39
  %319 = vmatpush.msra.mxu0 %v35
  %320 = vmatpush.msra.mxu0 %v31
  %321 = vmatpush.msra.mxu0 %v27
  %322 = vmatpush.msra.mxu0 %v23
  %323 = vmatmul.f32.gmra.mxu0 %v240
  %v324 = vpop.f32.mrf.mxu0
  %v325 = vadd.f32 0.0, %v324
  %326 = vdwg.mxu0
  %v327 = vadd.f32 %v243, %v265
  %v328 = vadd.f32 %v244, %v285
  %v329 = vadd.f32 %v245, %v305
  %v330 = vadd.f32 %v246, %v325
  %v331 = vxor.u32 %v327, 2147483648
  %v332 = vxor.u32 %v328, 2147483648
  %v333 = vxor.u32 %v329, 2147483648
  %v334 = vmul.f32 %v331, 1.442695
  %v335 = vpow.pop %v334
  %v336 = vmul.f32 %v332, 1.442695
  %v337 = vpow.pop %v336
  %v338 = vmul.f32 %v333, 1.442695
  %v339 = vpow.pop %v338
  %v340 = vadd.f32 %v335, 1.0
  %v341 = vadd.f32 %v337, 1.0
  %v342 = vadd.f32 %v339, 1.0
  %v343 = vrcp.pop %v340
  %v344 = vmul.f32 %v340, %v343
  %v345 = vsub.f32 1.0, %v344
  %v346 = vmul.f32 %v343, %v345
  %v347 = vadd.f32 %v343, %v346
  %vm348 = vweird.f32 %v340
  %vm349 = vweird.f32 %v343
  %vm350 = vmor %vm348, %vm349
  %v351 = vsel %vm350, %v343, %v347
  %v352 = vand.u32 2147483647, %v340
  %vm353 = vcmp.eq.f32.partialorder %v352, 8.507059e+37
  %v354 = vand.u32 %v340, 2147483648
  %v355 = vor.u32 1.1754944e-38, %v354
  %v356 = vsel %vm353, %v355, %v351
  %v357 = vmul.f32 1.0, %v356
  %v358 = vrcp.pop %v341
  %v359 = vmul.f32 %v341, %v358
  %v360 = vsub.f32 1.0, %v359
  %v361 = vmul.f32 %v358, %v360
  %v362 = vadd.f32 %v358, %v361
  %vm363 = vweird.f32 %v341
  %vm364 = vweird.f32 %v358
  %vm365 = vmor %vm363, %vm364
  %v366 = vsel %vm365, %v358, %v362
  %v367 = vand.u32 2147483647, %v341
  %vm368 = vcmp.eq.f32.partialorder %v367, 8.507059e+37
  %v369 = vand.u32 %v341, 2147483648
  %v370 = vor.u32 1.1754944e-38, %v369
  %v371 = vsel %vm368, %v370, %v366
  %v372 = vmul.f32 1.0, %v371
  %v373 = vrcp.pop %v342
  %v374 = vmul.f32 %v342, %v373
  %v375 = vsub.f32 1.0, %v374
  %v376 = vmul.f32 %v373, %v375
  %v377 = vadd.f32 %v373, %v376
  %vm378 = vweird.f32 %v342
  %vm379 = vweird.f32 %v373
  %vm380 = vmor %vm378, %vm379
  %v381 = vsel %vm380, %v373, %v377
  %v382 = vand.u32 2147483647, %v342
  %vm383 = vcmp.eq.f32.partialorder %v382, 8.507059e+37
  %v384 = vand.u32 %v342, 2147483648
  %v385 = vor.u32 1.1754944e-38, %v384
  %v386 = vsel %vm383, %v385, %v381
  %v387 = vmul.f32 1.0, %v386
  %v388 = vtanh.pop %v330
  %v389 = vmul.f32 %v372, %v241
  %v390 = vmul.f32 %v357, %v388
  %v391 = vadd.f32 %v389, %v390
  %v392 = vtanh.pop %v391
  %v393 = vmul.f32 %v387, %v392
  %394 = vst [vmem:[#allocation2] sm:$0xff] %v393
  %395 = vst [vmem:[#allocation3] sm:$0xff] %v391
  %s396 = scalar_lea.vmem %s2, 8
  %397 = vst [vmem:[%s396] sm:$0xff] %v393
  %v398 = vld [vmem:[#allocation2] sm:$0xff]
  %v399 = vld [vmem:[#allocation3] sm:$0xff]
  %s400 = scalar_lea.vmem %s0, 64
  %v401 = vld [vmem:[%s400] sm:$0xff]
  %v402 = vld [vmem:[%s400 + $0x8] sm:$0xff]
  %v403 = vld [vmem:[%s400 + $0x10] sm:$0xff]
  %v404 = vld [vmem:[%s400 + $0x18] sm:$0xff]
  %405 = vmatpush.msra.mxu0 %v80
  %406 = vmatpush.msra.mxu0 %v76
  %407 = vmatpush.msra.mxu0 %v72
  %408 = vmatpush.msra.mxu0 %v68
  %409 = vmatpush.msra.mxu0 %v64
  %410 = vmatpush.msra.mxu0 %v60
  %411 = vmatpush.msra.mxu0 %v56
  %412 = vmatpush.msra.mxu0 %v52
  %413 = vmatpush.msra.mxu0 %v48
  %414 = vmatpush.msra.mxu0 %v44
  %415 = vmatpush.msra.mxu0 %v40
  %416 = vmatpush.msra.mxu0 %v36
  %417 = vmatpush.msra.mxu0 %v32
  %418 = vmatpush.msra.mxu0 %v28
  %419 = vmatpush.msra.mxu0 %v24
  %420 = vmatpush.msra.mxu0 %v20
  %421 = vmatmul.f32.gmra.mxu0 %v398
  %v422 = vpop.f32.mrf.mxu0
  %v423 = vadd.f32 0.0, %v422
  %424 = vdwg.mxu0
  %425 = vmatpush.msra.mxu0 %v81
  %426 = vmatpush.msra.mxu0 %v77
  %427 = vmatpush.msra.mxu0 %v73
  %428 = vmatpush.msra.mxu0 %v69
  %429 = vmatpush.msra.mxu0 %v65
  %430 = vmatpush.msra.mxu0 %v61
  %431 = vmatpush.msra.mxu0 %v57
  %432 = vmatpush.msra.mxu0 %v53
  %433 = vmatpush.msra.mxu0 %v49
  %434 = vmatpush.msra.mxu0 %v45
  %435 = vmatpush.msra.mxu0 %v41
  %436 = vmatpush.msra.mxu0 %v37
  %437 = vmatpush.msra.mxu0 %v33
  %438 = vmatpush.msra.mxu0 %v29
  %439 = vmatpush.msra.mxu0 %v25
  %440 = vmatpush.msra.mxu0 %v21
  %441 = vmatmul.f32.gmra.mxu0 %v398
  %v442 = vpop.f32.mrf.mxu0
  %v443 = vadd.f32 0.0, %v442
  %444 = vdwg.mxu0
  %445 = vmatpush.msra.mxu0 %v82
  %446 = vmatpush.msra.mxu0 %v78
  %447 = vmatpush.msra.mxu0 %v74
  %448 = vmatpush.msra.mxu0 %v70
  %449 = vmatpush.msra.mxu0 %v66
  %450 = vmatpush.msra.mxu0 %v62
  %451 = vmatpush.msra.mxu0 %v58
  %452 = vmatpush.msra.mxu0 %v54
  %453 = vmatpush.msra.mxu0 %v50
  %454 = vmatpush.msra.mxu0 %v46
  %455 = vmatpush.msra.mxu0 %v42
  %456 = vmatpush.msra.mxu0 %v38
  %457 = vmatpush.msra.mxu0 %v34
  %458 = vmatpush.msra.mxu0 %v30
  %459 = vmatpush.msra.mxu0 %v26
  %460 = vmatpush.msra.mxu0 %v22
  %461 = vmatmul.f32.gmra.mxu0 %v398
  %v462 = vpop.f32.mrf.mxu0
  %v463 = vadd.f32 0.0, %v462
  %464 = vdwg.mxu0
  %465 = vmatpush.msra.mxu0 %v83
  %466 = vmatpush.msra.mxu0 %v79
  %467 = vmatpush.msra.mxu0 %v75
  %468 = vmatpush.msra.mxu0 %v71
  %469 = vmatpush.msra.mxu0 %v67
  %470 = vmatpush.msra.mxu0 %v63
  %471 = vmatpush.msra.mxu0 %v59
  %472 = vmatpush.msra.mxu0 %v55
  %473 = vmatpush.msra.mxu0 %v51
  %474 = vmatpush.msra.mxu0 %v47
  %475 = vmatpush.msra.mxu0 %v43
  %476 = vmatpush.msra.mxu0 %v39
  %477 = vmatpush.msra.mxu0 %v35
  %478 = vmatpush.msra.mxu0 %v31
  %479 = vmatpush.msra.mxu0 %v27
  %480 = vmatpush.msra.mxu0 %v23
  %481 = vmatmul.f32.gmra.mxu0 %v398
  %v482 = vpop.f32.mrf.mxu0
  %v483 = vadd.f32 0.0, %v482
  %484 = vdwg.mxu0
  %v485 = vadd.f32 %v401, %v423
  %v486 = vadd.f32 %v402, %v443
  %v487 = vadd.f32 %v403, %v463
  %v488 = vadd.f32 %v404, %v483
  %v489 = vxor.u32 %v485, 2147483648
  %v490 = vxor.u32 %v486, 2147483648
  %v491 = vxor.u32 %v487, 2147483648
  %v492 = vmul.f32 %v489, 1.442695
  %v493 = vpow.pop %v492
  %v494 = vmul.f32 %v490, 1.442695
  %v495 = vpow.pop %v494
  %v496 = vmul.f32 %v491, 1.442695
  %v497 = vpow.pop %v496
  %v498 = vadd.f32 %v493, 1.0
  %v499 = vadd.f32 %v495, 1.0
  %v500 = vadd.f32 %v497, 1.0
  %v501 = vrcp.pop %v498
  %v502 = vmul.f32 %v498, %v501
  %v503 = vsub.f32 1.0, %v502
  %v504 = vmul.f32 %v501, %v503
  %v505 = vadd.f32 %v501, %v504
  %vm506 = vweird.f32 %v498
  %vm507 = vweird.f32 %v501
  %vm508 = vmor %vm506, %vm507
  %v509 = vsel %vm508, %v501, %v505
  %v510 = vand.u32 2147483647, %v498
  %vm511 = vcmp.eq.f32.partialorder %v510, 8.507059e+37
  %v512 = vand.u32 %v498, 2147483648
  %v513 = vor.u32 1.1754944e-38, %v512
  %v514 = vsel %vm511, %v513, %v509
  %v515 = vmul.f32 1.0, %v514
  %v516 = vrcp.pop %v499
  %v517 = vmul.f32 %v499, %v516
  %v518 = vsub.f32 1.0, %v517
  %v519 = vmul.f32 %v516, %v518
  %v520 = vadd.f32 %v516, %v519
  %vm521 = vweird.f32 %v499
  %vm522 = vweird.f32 %v516
  %vm523 = vmor %vm521, %vm522
  %v524 = vsel %vm523, %v516, %v520
  %v525 = vand.u32 2147483647, %v499
  %vm526 = vcmp.eq.f32.partialorder %v525, 8.507059e+37
  %v527 = vand.u32 %v499, 2147483648
  %v528 = vor.u32 1.1754944e-38, %v527
  %v529 = vsel %vm526, %v528, %v524
  %v530 = vmul.f32 1.0, %v529
  %v531 = vrcp.pop %v500
  %v532 = vmul.f32 %v500, %v531
  %v533 = vsub.f32 1.0, %v532
  %v534 = vmul.f32 %v531, %v533
  %v535 = vadd.f32 %v531, %v534
  %vm536 = vweird.f32 %v500
  %vm537 = vweird.f32 %v531
  %vm538 = vmor %vm536, %vm537
  %v539 = vsel %vm538, %v531, %v535
  %v540 = vand.u32 2147483647, %v500
  %vm541 = vcmp.eq.f32.partialorder %v540, 8.507059e+37
  %v542 = vand.u32 %v500, 2147483648
  %v543 = vor.u32 1.1754944e-38, %v542
  %v544 = vsel %vm541, %v543, %v539
  %v545 = vmul.f32 1.0, %v544
  %v546 = vtanh.pop %v488
  %v547 = vmul.f32 %v530, %v399
  %v548 = vmul.f32 %v515, %v546
  %v549 = vadd.f32 %v547, %v548
  %v550 = vtanh.pop %v549
  %v551 = vmul.f32 %v545, %v550
  %552 = vst [vmem:[#allocation2] sm:$0xff] %v551
  %553 = vst [vmem:[#allocation3] sm:$0xff] %v549
  %s554 = scalar_lea.vmem %s2, 16
  %555 = vst [vmem:[%s554] sm:$0xff] %v551
  %v556 = vld [vmem:[#allocation2] sm:$0xff]
  %v557 = vld [vmem:[#allocation3] sm:$0xff]
  %s558 = scalar_lea.vmem %s0, 96
  %v559 = vld [vmem:[%s558] sm:$0xff]
  %v560 = vld [vmem:[%s558 + $0x8] sm:$0xff]
  %v561 = vld [vmem:[%s558 + $0x10] sm:$0xff]
  %v562 = vld [vmem:[%s558 + $0x18] sm:$0xff]
  %563 = vmatpush.msra.mxu0 %v80
  %564 = vmatpush.msra.mxu0 %v76
  %565 = vmatpush.msra.mxu0 %v72
  %566 = vmatpush.msra.mxu0 %v68
  %567 = vmatpush.msra.mxu0 %v64
  %568 = vmatpush.msra.mxu0 %v60
  %569 = vmatpush.msra.mxu0 %v56
  %570 = vmatpush.msra.mxu0 %v52
  %571 = vmatpush.msra.mxu0 %v48
  %572 = vmatpush.msra.mxu0 %v44
  %573 = vmatpush.msra.mxu0 %v40
  %574 = vmatpush.msra.mxu0 %v36
  %575 = vmatpush.msra.mxu0 %v32
  %576 = vmatpush.msra.mxu0 %v28
  %577 = vmatpush.msra.mxu0 %v24
  %578 = vmatpush.msra.mxu0 %v20
  %579 = vmatmul.f32.gmra.mxu0 %v556
  %v580 = vpop.f32.mrf.mxu0
  %v581 = vadd.f32 0.0, %v580
  %582 = vdwg.mxu0
  %583 = vmatpush.msra.mxu0 %v81
  %584 = vmatpush.msra.mxu0 %v77
  %585 = vmatpush.msra.mxu0 %v73
  %586 = vmatpush.msra.mxu0 %v69
  %587 = vmatpush.msra.mxu0 %v65
  %588 = vmatpush.msra.mxu0 %v61
  %589 = vmatpush.msra.mxu0 %v57
  %590 = vmatpush.msra.mxu0 %v53
  %591 = vmatpush.msra.mxu0 %v49
  %592 = vmatpush.msra.mxu0 %v45
  %593 = vmatpush.msra.mxu0 %v41
  %594 = vmatpush.msra.mxu0 %v37
  %595 = vmatpush.msra.mxu0 %v33
  %596 = vmatpush.msra.mxu0 %v29
  %597 = vmatpush.msra.mxu0 %v25
  %598 = vmatpush.msra.mxu0 %v21
  %599 = vmatmul.f32.gmra.mxu0 %v556
  %v600 = vpop.f32.mrf.mxu0
  %v601 = vadd.f32 0.0, %v600
  %602 = vdwg.mxu0
  %603 = vmatpush.msra.mxu0 %v82
  %604 = vmatpush.msra.mxu0 %v78
  %605 = vmatpush.msra.mxu0 %v74
  %606 = vmatpush.msra.mxu0 %v70
  %607 = vmatpush.msra.mxu0 %v66
  %608 = vmatpush.msra.mxu0 %v62
  %609 = vmatpush.msra.mxu0 %v58
  %610 = vmatpush.msra.mxu0 %v54
  %611 = vmatpush.msra.mxu0 %v50
  %612 = vmatpush.msra.mxu0 %v46
  %613 = vmatpush.msra.mxu0 %v42
  %614 = vmatpush.msra.mxu0 %v38
  %615 = vmatpush.msra.mxu0 %v34
  %616 = vmatpush.msra.mxu0 %v30
  %617 = vmatpush.msra.mxu0 %v26
  %618 = vmatpush.msra.mxu0 %v22
  %619 = vmatmul.f32.gmra.mxu0 %v556
  %v620 = vpop.f32.mrf.mxu0
  %v621 = vadd.f32 0.0, %v620
  %622 = vdwg.mxu0
  %623 = vmatpush.msra.mxu0 %v83
  %624 = vmatpush.msra.mxu0 %v79
  %625 = vmatpush.msra.mxu0 %v75
  %626 = vmatpush.msra.mxu0 %v71
  %627 = vmatpush.msra.mxu0 %v67
  %628 = vmatpush.msra.mxu0 %v63
  %629 = vmatpush.msra.mxu0 %v59
  %630 = vmatpush.msra.mxu0 %v55
  %631 = vmatpush.msra.mxu0 %v51
  %632 = vmatpush.msra.mxu0 %v47
  %633 = vmatpush.msra.mxu0 %v43
  %634 = vmatpush.msra.mxu0 %v39
  %635 = vmatpush.msra.mxu0 %v35
  %636 = vmatpush.msra.mxu0 %v31
  %637 = vmatpush.msra.mxu0 %v27
  %638 = vmatpush.msra.mxu0 %v23
  %639 = vmatmul.f32.gmra.mxu0 %v556
  %v640 = vpop.f32.mrf.mxu0
  %v641 = vadd.f32 0.0, %v640
  %642 = vdwg.mxu0
  %v643 = vadd.f32 %v559, %v581
  %v644 = vadd.f32 %v560, %v601
  %v645 = vadd.f32 %v561, %v621
  %v646 = vadd.f32 %v562, %v641
  %v647 = vxor.u32 %v643, 2147483648
  %v648 = vxor.u32 %v644, 2147483648
  %v649 = vxor.u32 %v645, 2147483648
  %v650 = vmul.f32 %v647, 1.442695
  %v651 = vpow.pop %v650
  %v652 = vmul.f32 %v648, 1.442695
  %v653 = vpow.pop %v652
  %v654 = vmul.f32 %v649, 1.442695
  %v655 = vpow.pop %v654
  %v656 = vadd.f32 %v651, 1.0
  %v657 = vadd.f32 %v653, 1.0
  %v658 = vadd.f32 %v655, 1.0
  %v659 = vrcp.pop %v656
  %v660 = vmul.f32 %v656, %v659
  %v661 = vsub.f32 1.0, %v660
  %v662 = vmul.f32 %v659, %v661
  %v663 = vadd.f32 %v659, %v662
  %vm664 = vweird.f32 %v656
  %vm665 = vweird.f32 %v659
  %vm666 = vmor %vm664, %vm665
  %v667 = vsel %vm666, %v659, %v663
  %v668 = vand.u32 2147483647, %v656
  %vm669 = vcmp.eq.f32.partialorder %v668, 8.507059e+37
  %v670 = vand.u32 %v656, 2147483648
  %v671 = vor.u32 1.1754944e-38, %v670
  %v672 = vsel %vm669, %v671, %v667
  %v673 = vmul.f32 1.0, %v672
  %v674 = vrcp.pop %v657
  %v675 = vmul.f32 %v657, %v674
  %v676 = vsub.f32 1.0, %v675
  %v677 = vmul.f32 %v674, %v676
  %v678 = vadd.f32 %v674, %v677
  %vm679 = vweird.f32 %v657
  %vm680 = vweird.f32 %v674
  %vm681 = vmor %vm679, %vm680
  %v682 = vsel %vm681, %v674, %v678
  %v683 = vand.u32 2147483647, %v657
  %vm684 = vcmp.eq.f32.partialorder %v683, 8.507059e+37
  %v685 = vand.u32 %v657, 2147483648
  %v686 = vor.u32 1.1754944e-38, %v685
  %v687 = vsel %vm684, %v686, %v682
  %v688 = vmul.f32 1.0, %v687
  %v689 = vrcp.pop %v658
  %v690 = vmul.f32 %v658, %v689
  %v691 = vsub.f32 1.0, %v690
  %v692 = vmul.f32 %v689, %v691
  %v693 = vadd.f32 %v689, %v692
  %vm694 = vweird.f32 %v658
  %vm695 = vweird.f32 %v689
  %vm696 = vmor %vm694, %vm695
  %v697 = vsel %vm696, %v689, %v693
  %v698 = vand.u32 2147483647, %v658
  %vm699 = vcmp.eq.f32.partialorder %v698, 8.507059e+37
  %v700 = vand.u32 %v658, 2147483648
  %v701 = vor.u32 1.1754944e-38, %v700
  %v702 = vsel %vm699, %v701, %v697
  %v703 = vmul.f32 1.0, %v702
  %v704 = vtanh.pop %v646
  %v705 = vmul.f32 %v688, %v557
  %v706 = vmul.f32 %v673, %v704
  %v707 = vadd.f32 %v705, %v706
  %v708 = vtanh.pop %v707
  %v709 = vmul.f32 %v703, %v708
  %710 = vst [vmem:[#allocation2] sm:$0xff] %v709
  %711 = vst [vmem:[#allocation3] sm:$0xff] %v707
  %s712 = scalar_lea.vmem %s2, 24
  %713 = vst [vmem:[%s712] sm:$0xff] %v709
  %v714 = vld [vmem:[#allocation2] sm:$0xff]
  %v715 = vld [vmem:[#allocation3] sm:$0xff]
  %s716 = scalar_lea.vmem %s0, 128
  %v717 = vld [vmem:[%s716] sm:$0xff]
  %v718 = vld [vmem:[%s716 + $0x8] sm:$0xff]
  %v719 = vld [vmem:[%s716 + $0x10] sm:$0xff]
  %v720 = vld [vmem:[%s716 + $0x18] sm:$0xff]
  %721 = vmatpush.msra.mxu0 %v80
  %722 = vmatpush.msra.mxu0 %v76
  %723 = vmatpush.msra.mxu0 %v72
  %724 = vmatpush.msra.mxu0 %v68
  %725 = vmatpush.msra.mxu0 %v64
  %726 = vmatpush.msra.mxu0 %v60
  %727 = vmatpush.msra.mxu0 %v56
  %728 = vmatpush.msra.mxu0 %v52
  %729 = vmatpush.msra.mxu0 %v48
  %730 = vmatpush.msra.mxu0 %v44
  %731 = vmatpush.msra.mxu0 %v40
  %732 = vmatpush.msra.mxu0 %v36
  %733 = vmatpush.msra.mxu0 %v32
  %734 = vmatpush.msra.mxu0 %v28
  %735 = vmatpush.msra.mxu0 %v24
  %736 = vmatpush.msra.mxu0 %v20
  %737 = vmatmul.f32.gmra.mxu0 %v714
  %v738 = vpop.f32.mrf.mxu0
  %v739 = vadd.f32 0.0, %v738
  %740 = vdwg.mxu0
  %741 = vmatpush.msra.mxu0 %v81
  %742 = vmatpush.msra.mxu0 %v77
  %743 = vmatpush.msra.mxu0 %v73
  %744 = vmatpush.msra.mxu0 %v69
  %745 = vmatpush.msra.mxu0 %v65
  %746 = vmatpush.msra.mxu0 %v61
  %747 = vmatpush.msra.mxu0 %v57
  %748 = vmatpush.msra.mxu0 %v53
  %749 = vmatpush.msra.mxu0 %v49
  %750 = vmatpush.msra.mxu0 %v45
  %751 = vmatpush.msra.mxu0 %v41
  %752 = vmatpush.msra.mxu0 %v37
  %753 = vmatpush.msra.mxu0 %v33
  %754 = vmatpush.msra.mxu0 %v29
  %755 = vmatpush.msra.mxu0 %v25
  %756 = vmatpush.msra.mxu0 %v21
  %757 = vmatmul.f32.gmra.mxu0 %v714
  %v758 = vpop.f32.mrf.mxu0
  %v759 = vadd.f32 0.0, %v758
  %760 = vdwg.mxu0
  %761 = vmatpush.msra.mxu0 %v82
  %762 = vmatpush.msra.mxu0 %v78
  %763 = vmatpush.msra.mxu0 %v74
  %764 = vmatpush.msra.mxu0 %v70
  %765 = vmatpush.msra.mxu0 %v66
  %766 = vmatpush.msra.mxu0 %v62
  %767 = vmatpush.msra.mxu0 %v58
  %768 = vmatpush.msra.mxu0 %v54
  %769 = vmatpush.msra.mxu0 %v50
  %770 = vmatpush.msra.mxu0 %v46
  %771 = vmatpush.msra.mxu0 %v42
  %772 = vmatpush.msra.mxu0 %v38
  %773 = vmatpush.msra.mxu0 %v34
  %774 = vmatpush.msra.mxu0 %v30
  %775 = vmatpush.msra.mxu0 %v26
  %776 = vmatpush.msra.mxu0 %v22
  %777 = vmatmul.f32.gmra.mxu0 %v714
  %v778 = vpop.f32.mrf.mxu0
  %v779 = vadd.f32 0.0, %v778
  %780 = vdwg.mxu0
  %781 = vmatpush.msra.mxu0 %v83
  %782 = vmatpush.msra.mxu0 %v79
  %783 = vmatpush.msra.mxu0 %v75
  %784 = vmatpush.msra.mxu0 %v71
  %785 = vmatpush.msra.mxu0 %v67
  %786 = vmatpush.msra.mxu0 %v63
  %787 = vmatpush.msra.mxu0 %v59
  %788 = vmatpush.msra.mxu0 %v55
  %789 = vmatpush.msra.mxu0 %v51
  %790 = vmatpush.msra.mxu0 %v47
  %791 = vmatpush.msra.mxu0 %v43
  %792 = vmatpush.msra.mxu0 %v39
  %793 = vmatpush.msra.mxu0 %v35
  %794 = vmatpush.msra.mxu0 %v31
  %795 = vmatpush.msra.mxu0 %v27
  %796 = vmatpush.msra.mxu0 %v23
  %797 = vmatmul.f32.gmra.mxu0 %v714
  %v798 = vpop.f32.mrf.mxu0
  %v799 = vadd.f32 0.0, %v798
  %800 = vdwg.mxu0
  %v801 = vadd.f32 %v717, %v739
  %v802 = vadd.f32 %v718, %v759
  %v803 = vadd.f32 %v719, %v779
  %v804 = vadd.f32 %v720, %v799
  %v805 = vxor.u32 %v801, 2147483648
  %v806 = vxor.u32 %v802, 2147483648
  %v807 = vxor.u32 %v803, 2147483648
  %v808 = vmul.f32 %v805, 1.442695
  %v809 = vpow.pop %v808
  %v810 = vmul.f32 %v806, 1.442695
  %v811 = vpow.pop %v810
  %v812 = vmul.f32 %v807, 1.442695
  %v813 = vpow.pop %v812
  %v814 = vadd.f32 %v809, 1.0
  %v815 = vadd.f32 %v811, 1.0
  %v816 = vadd.f32 %v813, 1.0
  %v817 = vrcp.pop %v814
  %v818 = vmul.f32 %v814, %v817
  %v819 = vsub.f32 1.0, %v818
  %v820 = vmul.f32 %v817, %v819
  %v821 = vadd.f32 %v817, %v820
  %vm822 = vweird.f32 %v814
  %vm823 = vweird.f32 %v817
  %vm824 = vmor %vm822, %vm823
  %v825 = vsel %vm824, %v817, %v821
  %v826 = vand.u32 2147483647, %v814
  %vm827 = vcmp.eq.f32.partialorder %v826, 8.507059e+37
  %v828 = vand.u32 %v814, 2147483648
  %v829 = vor.u32 1.1754944e-38, %v828
  %v830 = vsel %vm827, %v829, %v825
  %v831 = vmul.f32 1.0, %v830
  %v832 = vrcp.pop %v815
  %v833 = vmul.f32 %v815, %v832
  %v834 = vsub.f32 1.0, %v833
  %v835 = vmul.f32 %v832, %v834
  %v836 = vadd.f32 %v832, %v835
  %vm837 = vweird.f32 %v815
  %vm838 = vweird.f32 %v832
  %vm839 = vmor %vm837, %vm838
  %v840 = vsel %vm839, %v832, %v836
  %v841 = vand.u32 2147483647, %v815
  %vm842 = vcmp.eq.f32.partialorder %v841, 8.507059e+37
  %v843 = vand.u32 %v815, 2147483648
  %v844 = vor.u32 1.1754944e-38, %v843
  %v845 = vsel %vm842, %v844, %v840
  %v846 = vmul.f32 1.0, %v845
  %v847 = vrcp.pop %v816
  %v848 = vmul.f32 %v816, %v847
  %v849 = vsub.f32 1.0, %v848
  %v850 = vmul.f32 %v847, %v849
  %v851 = vadd.f32 %v847, %v850
  %vm852 = vweird.f32 %v816
  %vm853 = vweird.f32 %v847
  %vm854 = vmor %vm852, %vm853
  %v855 = vsel %vm854, %v847, %v851
  %v856 = vand.u32 2147483647, %v816
  %vm857 = vcmp.eq.f32.partialorder %v856, 8.507059e+37
  %v858 = vand.u32 %v816, 2147483648
  %v859 = vor.u32 1.1754944e-38, %v858
  %v860 = vsel %vm857, %v859, %v855
  %v861 = vmul.f32 1.0, %v860
  %v862 = vtanh.pop %v804
  %v863 = vmul.f32 %v846, %v715
  %v864 = vmul.f32 %v831, %v862
  %v865 = vadd.f32 %v863, %v864
  %v866 = vtanh.pop %v865
  %v867 = vmul.f32 %v861, %v866
  %868 = vst [vmem:[#allocation2] sm:$0xff] %v867
  %869 = vst [vmem:[#allocation3] sm:$0xff] %v865
  %s870 = scalar_lea.vmem %s2, 32
  %871 = vst [vmem:[%s870] sm:$0xff] %v867
  %v872 = vld [vmem:[#allocation2] sm:$0xff]
  %v873 = vld [vmem:[#allocation3] sm:$0xff]
  %s874 = scalar_lea.vmem %s0, 160
  %v875 = vld [vmem:[%s874] sm:$0xff]
  %v876 = vld [vmem:[%s874 + $0x8] sm:$0xff]
  %v877 = vld [vmem:[%s874 + $0x10] sm:$0xff]
  %v878 = vld [vmem:[%s874 + $0x18] sm:$0xff]
  %879 = vmatpush.msra.mxu0 %v80
  %880 = vmatpush.msra.mxu0 %v76
  %881 = vmatpush.msra.mxu0 %v72
  %882 = vmatpush.msra.mxu0 %v68
  %883 = vmatpush.msra.mxu0 %v64
  %884 = vmatpush.msra.mxu0 %v60
  %885 = vmatpush.msra.mxu0 %v56
  %886 = vmatpush.msra.mxu0 %v52
  %887 = vmatpush.msra.mxu0 %v48
  %888 = vmatpush.msra.mxu0 %v44
  %889 = vmatpush.msra.mxu0 %v40
  %890 = vmatpush.msra.mxu0 %v36
  %891 = vmatpush.msra.mxu0 %v32
  %892 = vmatpush.msra.mxu0 %v28
  %893 = vmatpush.msra.mxu0 %v24
  %894 = vmatpush.msra.mxu0 %v20
  %895 = vmatmul.f32.gmra.mxu0 %v872
  %v896 = vpop.f32.mrf.mxu0
  %v897 = vadd.f32 0.0, %v896
  %898 = vdwg.mxu0
  %899 = vmatpush.msra.mxu0 %v81
  %900 = vmatpush.msra.mxu0 %v77
  %901 = vmatpush.msra.mxu0 %v73
  %902 = vmatpush.msra.mxu0 %v69
  %903 = vmatpush.msra.mxu0 %v65
  %904 = vmatpush.msra.mxu0 %v61
  %905 = vmatpush.msra.mxu0 %v57
  %906 = vmatpush.msra.mxu0 %v53
  %907 = vmatpush.msra.mxu0 %v49
  %908 = vmatpush.msra.mxu0 %v45
  %909 = vmatpush.msra.mxu0 %v41
  %910 = vmatpush.msra.mxu0 %v37
  %911 = vmatpush.msra.mxu0 %v33
  %912 = vmatpush.msra.mxu0 %v29
  %913 = vmatpush.msra.mxu0 %v25
  %914 = vmatpush.msra.mxu0 %v21
  %915 = vmatmul.f32.gmra.mxu0 %v872
  %v916 = vpop.f32.mrf.mxu0
  %v917 = vadd.f32 0.0, %v916
  %918 = vdwg.mxu0
  %919 = vmatpush.msra.mxu0 %v82
  %920 = vmatpush.msra.mxu0 %v78
  %921 = vmatpush.msra.mxu0 %v74
  %922 = vmatpush.msra.mxu0 %v70
  %923 = vmatpush.msra.mxu0 %v66
  %924 = vmatpush.msra.mxu0 %v62
  %925 = vmatpush.msra.mxu0 %v58
  %926 = vmatpush.msra.mxu0 %v54
  %927 = vmatpush.msra.mxu0 %v50
  %928 = vmatpush.msra.mxu0 %v46
  %929 = vmatpush.msra.mxu0 %v42
  %930 = vmatpush.msra.mxu0 %v38
  %931 = vmatpush.msra.mxu0 %v34
  %932 = vmatpush.msra.mxu0 %v30
  %933 = vmatpush.msra.mxu0 %v26
  %934 = vmatpush.msra.mxu0 %v22
  %935 = vmatmul.f32.gmra.mxu0 %v872
  %v936 = vpop.f32.mrf.mxu0
  %v937 = vadd.f32 0.0, %v936
  %938 = vdwg.mxu0
  %939 = vmatpush.msra.mxu0 %v83
  %940 = vmatpush.msra.mxu0 %v79
  %941 = vmatpush.msra.mxu0 %v75
  %942 = vmatpush.msra.mxu0 %v71
  %943 = vmatpush.msra.mxu0 %v67
  %944 = vmatpush.msra.mxu0 %v63
  %945 = vmatpush.msra.mxu0 %v59
  %946 = vmatpush.msra.mxu0 %v55
  %947 = vmatpush.msra.mxu0 %v51
  %948 = vmatpush.msra.mxu0 %v47
  %949 = vmatpush.msra.mxu0 %v43
  %950 = vmatpush.msra.mxu0 %v39
  %951 = vmatpush.msra.mxu0 %v35
  %952 = vmatpush.msra.mxu0 %v31
  %953 = vmatpush.msra.mxu0 %v27
  %954 = vmatpush.msra.mxu0 %v23
  %955 = vmatmul.f32.gmra.mxu0 %v872
  %v956 = vpop.f32.mrf.mxu0
  %v957 = vadd.f32 0.0, %v956
  %958 = vdwg.mxu0
  %v959 = vadd.f32 %v875, %v897
  %v960 = vadd.f32 %v876, %v917
  %v961 = vadd.f32 %v877, %v937
  %v962 = vadd.f32 %v878, %v957
  %v963 = vxor.u32 %v959, 2147483648
  %v964 = vxor.u32 %v960, 2147483648
  %v965 = vxor.u32 %v961, 2147483648
  %v966 = vmul.f32 %v963, 1.442695
  %v967 = vpow.pop %v966
  %v968 = vmul.f32 %v964, 1.442695
  %v969 = vpow.pop %v968
  %v970 = vmul.f32 %v965, 1.442695
  %v971 = vpow.pop %v970
  %v972 = vadd.f32 %v967, 1.0
  %v973 = vadd.f32 %v969, 1.0
  %v974 = vadd.f32 %v971, 1.0
  %v975 = vrcp.pop %v972
  %v976 = vmul.f32 %v972, %v975
  %v977 = vsub.f32 1.0, %v976
  %v978 = vmul.f32 %v975, %v977
  %v979 = vadd.f32 %v975, %v978
  %vm980 = vweird.f32 %v972
  %vm981 = vweird.f32 %v975
  %vm982 = vmor %vm980, %vm981
  %v983 = vsel %vm982, %v975, %v979
  %v984 = vand.u32 2147483647, %v972
  %vm985 = vcmp.eq.f32.partialorder %v984, 8.507059e+37
  %v986 = vand.u32 %v972, 2147483648
  %v987 = vor.u32 1.1754944e-38, %v986
  %v988 = vsel %vm985, %v987, %v983
  %v989 = vmul.f32 1.0, %v988
  %v990 = vrcp.pop %v973
  %v991 = vmul.f32 %v973, %v990
  %v992 = vsub.f32 1.0, %v991
  %v993 = vmul.f32 %v990, %v992
  %v994 = vadd.f32 %v990, %v993
  %vm995 = vweird.f32 %v973
  %vm996 = vweird.f32 %v990
  %vm997 = vmor %vm995, %vm996
  %v998 = vsel %vm997, %v990, %v994
  %v999 = vand.u32 2147483647, %v973
  %vm1000 = vcmp.eq.f32.partialorder %v999, 8.507059e+37
  %v1001 = vand.u32 %v973, 2147483648
  %v1002 = vor.u32 1.1754944e-38, %v1001
  %v1003 = vsel %vm1000, %v1002, %v998
  %v1004 = vmul.f32 1.0, %v1003
  %v1005 = vrcp.pop %v974
  %v1006 = vmul.f32 %v974, %v1005
  %v1007 = vsub.f32 1.0, %v1006
  %v1008 = vmul.f32 %v1005, %v1007
  %v1009 = vadd.f32 %v1005, %v1008
  %vm1010 = vweird.f32 %v974
  %vm1011 = vweird.f32 %v1005
  %vm1012 = vmor %vm1010, %vm1011
  %v1013 = vsel %vm1012, %v1005, %v1009
  %v1014 = vand.u32 2147483647, %v974
  %vm1015 = vcmp.eq.f32.partialorder %v1014, 8.507059e+37
  %v1016 = vand.u32 %v974, 2147483648
  %v1017 = vor.u32 1.1754944e-38, %v1016
  %v1018 = vsel %vm1015, %v1017, %v1013
  %v1019 = vmul.f32 1.0, %v1018
  %v1020 = vtanh.pop %v962
  %v1021 = vmul.f32 %v1004, %v873
  %v1022 = vmul.f32 %v989, %v1020
  %v1023 = vadd.f32 %v1021, %v1022
  %v1024 = vtanh.pop %v1023
  %v1025 = vmul.f32 %v1019, %v1024
  %1026 = vst [vmem:[#allocation2] sm:$0xff] %v1025
  %1027 = vst [vmem:[#allocation3] sm:$0xff] %v1023
  %s1028 = scalar_lea.vmem %s2, 40
  %1029 = vst [vmem:[%s1028] sm:$0xff] %v1025
  %v1030 = vld [vmem:[#allocation2] sm:$0xff]
  %v1031 = vld [vmem:[#allocation3] sm:$0xff]
  %s1032 = scalar_lea.vmem %s0, 192
  %v1033 = vld [vmem:[%s1032] sm:$0xff]
  %v1034 = vld [vmem:[%s1032 + $0x8] sm:$0xff]
  %v1035 = vld [vmem:[%s1032 + $0x10] sm:$0xff]
  %v1036 = vld [vmem:[%s1032 + $0x18] sm:$0xff]
  %1037 = vmatpush.msra.mxu0 %v80
  %1038 = vmatpush.msra.mxu0 %v76
  %1039 = vmatpush.msra.mxu0 %v72
  %1040 = vmatpush.msra.mxu0 %v68
  %1041 = vmatpush.msra.mxu0 %v64
  %1042 = vmatpush.msra.mxu0 %v60
  %1043 = vmatpush.msra.mxu0 %v56
  %1044 = vmatpush.msra.mxu0 %v52
  %1045 = vmatpush.msra.mxu0 %v48
  %1046 = vmatpush.msra.mxu0 %v44
  %1047 = vmatpush.msra.mxu0 %v40
  %1048 = vmatpush.msra.mxu0 %v36
  %1049 = vmatpush.msra.mxu0 %v32
  %1050 = vmatpush.msra.mxu0 %v28
  %1051 = vmatpush.msra.mxu0 %v24
  %1052 = vmatpush.msra.mxu0 %v20
  %1053 = vmatmul.f32.gmra.mxu0 %v1030
  %v1054 = vpop.f32.mrf.mxu0
  %v1055 = vadd.f32 0.0, %v1054
  %1056 = vdwg.mxu0
  %1057 = vmatpush.msra.mxu0 %v81
  %1058 = vmatpush.msra.mxu0 %v77
  %1059 = vmatpush.msra.mxu0 %v73
  %1060 = vmatpush.msra.mxu0 %v69
  %1061 = vmatpush.msra.mxu0 %v65
  %1062 = vmatpush.msra.mxu0 %v61
  %1063 = vmatpush.msra.mxu0 %v57
  %1064 = vmatpush.msra.mxu0 %v53
  %1065 = vmatpush.msra.mxu0 %v49
  %1066 = vmatpush.msra.mxu0 %v45
  %1067 = vmatpush.msra.mxu0 %v41
  %1068 = vmatpush.msra.mxu0 %v37
  %1069 = vmatpush.msra.mxu0 %v33
  %1070 = vmatpush.msra.mxu0 %v29
  %1071 = vmatpush.msra.mxu0 %v25
  %1072 = vmatpush.msra.mxu0 %v21
  %1073 = vmatmul.f32.gmra.mxu0 %v1030
  %v1074 = vpop.f32.mrf.mxu0
  %v1075 = vadd.f32 0.0, %v1074
  %1076 = vdwg.mxu0
  %1077 = vmatpush.msra.mxu0 %v82
  %1078 = vmatpush.msra.mxu0 %v78
  %1079 = vmatpush.msra.mxu0 %v74
  %1080 = vmatpush.msra.mxu0 %v70
  %1081 = vmatpush.msra.mxu0 %v66
  %1082 = vmatpush.msra.mxu0 %v62
  %1083 = vmatpush.msra.mxu0 %v58
  %1084 = vmatpush.msra.mxu0 %v54
  %1085 = vmatpush.msra.mxu0 %v50
  %1086 = vmatpush.msra.mxu0 %v46
  %1087 = vmatpush.msra.mxu0 %v42
  %1088 = vmatpush.msra.mxu0 %v38
  %1089 = vmatpush.msra.mxu0 %v34
  %1090 = vmatpush.msra.mxu0 %v30
  %1091 = vmatpush.msra.mxu0 %v26
  %1092 = vmatpush.msra.mxu0 %v22
  %1093 = vmatmul.f32.gmra.mxu0 %v1030
  %v1094 = vpop.f32.mrf.mxu0
  %v1095 = vadd.f32 0.0, %v1094
  %1096 = vdwg.mxu0
  %1097 = vmatpush.msra.mxu0 %v83
  %1098 = vmatpush.msra.mxu0 %v79
  %1099 = vmatpush.msra.mxu0 %v75
  %1100 = vmatpush.msra.mxu0 %v71
  %1101 = vmatpush.msra.mxu0 %v67
  %1102 = vmatpush.msra.mxu0 %v63
  %1103 = vmatpush.msra.mxu0 %v59
  %1104 = vmatpush.msra.mxu0 %v55
  %1105 = vmatpush.msra.mxu0 %v51
  %1106 = vmatpush.msra.mxu0 %v47
  %1107 = vmatpush.msra.mxu0 %v43
  %1108 = vmatpush.msra.mxu0 %v39
  %1109 = vmatpush.msra.mxu0 %v35
  %1110 = vmatpush.msra.mxu0 %v31
  %1111 = vmatpush.msra.mxu0 %v27
  %1112 = vmatpush.msra.mxu0 %v23
  %1113 = vmatmul.f32.gmra.mxu0 %v1030
  %v1114 = vpop.f32.mrf.mxu0
  %v1115 = vadd.f32 0.0, %v1114
  %1116 = vdwg.mxu0
  %v1117 = vadd.f32 %v1033, %v1055
  %v1118 = vadd.f32 %v1034, %v1075
  %v1119 = vadd.f32 %v1035, %v1095
  %v1120 = vadd.f32 %v1036, %v1115
  %v1121 = vxor.u32 %v1117, 2147483648
  %v1122 = vxor.u32 %v1118, 2147483648
  %v1123 = vxor.u32 %v1119, 2147483648
  %v1124 = vmul.f32 %v1121, 1.442695
  %v1125 = vpow.pop %v1124
  %v1126 = vmul.f32 %v1122, 1.442695
  %v1127 = vpow.pop %v1126
  %v1128 = vmul.f32 %v1123, 1.442695
  %v1129 = vpow.pop %v1128
  %v1130 = vadd.f32 %v1125, 1.0
  %v1131 = vadd.f32 %v1127, 1.0
  %v1132 = vadd.f32 %v1129, 1.0
  %v1133 = vrcp.pop %v1130
  %v1134 = vmul.f32 %v1130, %v1133
  %v1135 = vsub.f32 1.0, %v1134
  %v1136 = vmul.f32 %v1133, %v1135
  %v1137 = vadd.f32 %v1133, %v1136
  %vm1138 = vweird.f32 %v1130
  %vm1139 = vweird.f32 %v1133
  %vm1140 = vmor %vm1138, %vm1139
  %v1141 = vsel %vm1140, %v1133, %v1137
  %v1142 = vand.u32 2147483647, %v1130
  %vm1143 = vcmp.eq.f32.partialorder %v1142, 8.507059e+37
  %v1144 = vand.u32 %v1130, 2147483648
  %v1145 = vor.u32 1.1754944e-38, %v1144
  %v1146 = vsel %vm1143, %v1145, %v1141
  %v1147 = vmul.f32 1.0, %v1146
  %v1148 = vrcp.pop %v1131
  %v1149 = vmul.f32 %v1131, %v1148
  %v1150 = vsub.f32 1.0, %v1149
  %v1151 = vmul.f32 %v1148, %v1150
  %v1152 = vadd.f32 %v1148, %v1151
  %vm1153 = vweird.f32 %v1131
  %vm1154 = vweird.f32 %v1148
  %vm1155 = vmor %vm1153, %vm1154
  %v1156 = vsel %vm1155, %v1148, %v1152
  %v1157 = vand.u32 2147483647, %v1131
  %vm1158 = vcmp.eq.f32.partialorder %v1157, 8.507059e+37
  %v1159 = vand.u32 %v1131, 2147483648
  %v1160 = vor.u32 1.1754944e-38, %v1159
  %v1161 = vsel %vm1158, %v1160, %v1156
  %v1162 = vmul.f32 1.0, %v1161
  %v1163 = vrcp.pop %v1132
  %v1164 = vmul.f32 %v1132, %v1163
  %v1165 = vsub.f32 1.0, %v1164
  %v1166 = vmul.f32 %v1163, %v1165
  %v1167 = vadd.f32 %v1163, %v1166
  %vm1168 = vweird.f32 %v1132
  %vm1169 = vweird.f32 %v1163
  %vm1170 = vmor %vm1168, %vm1169
  %v1171 = vsel %vm1170, %v1163, %v1167
  %v1172 = vand.u32 2147483647, %v1132
  %vm1173 = vcmp.eq.f32.partialorder %v1172, 8.507059e+37
  %v1174 = vand.u32 %v1132, 2147483648
  %v1175 = vor.u32 1.1754944e-38, %v1174
  %v1176 = vsel %vm1173, %v1175, %v1171
  %v1177 = vmul.f32 1.0, %v1176
  %v1178 = vtanh.pop %v1120
  %v1179 = vmul.f32 %v1162, %v1031
  %v1180 = vmul.f32 %v1147, %v1178
  %v1181 = vadd.f32 %v1179, %v1180
  %v1182 = vtanh.pop %v1181
  %v1183 = vmul.f32 %v1177, %v1182
  %1184 = vst [vmem:[#allocation2] sm:$0xff] %v1183
  %1185 = vst [vmem:[#allocation3] sm:$0xff] %v1181
  %s1186 = scalar_lea.vmem %s2, 48
  %1187 = vst [vmem:[%s1186] sm:$0xff] %v1183
  %v1188 = vld [vmem:[#allocation2] sm:$0xff]
  %v1189 = vld [vmem:[#allocation3] sm:$0xff]
  %s1190 = scalar_lea.vmem %s0, 224
  %v1191 = vld [vmem:[%s1190] sm:$0xff]
  %v1192 = vld [vmem:[%s1190 + $0x8] sm:$0xff]
  %v1193 = vld [vmem:[%s1190 + $0x10] sm:$0xff]
  %v1194 = vld [vmem:[%s1190 + $0x18] sm:$0xff]
  %1195 = vmatpush.msra.mxu0 %v80
  %1196 = vmatpush.msra.mxu0 %v76
  %1197 = vmatpush.msra.mxu0 %v72
  %1198 = vmatpush.msra.mxu0 %v68
  %1199 = vmatpush.msra.mxu0 %v64
  %1200 = vmatpush.msra.mxu0 %v60
  %1201 = vmatpush.msra.mxu0 %v56
  %1202 = vmatpush.msra.mxu0 %v52
  %1203 = vmatpush.msra.mxu0 %v48
  %1204 = vmatpush.msra.mxu0 %v44
  %1205 = vmatpush.msra.mxu0 %v40
  %1206 = vmatpush.msra.mxu0 %v36
  %1207 = vmatpush.msra.mxu0 %v32
  %1208 = vmatpush.msra.mxu0 %v28
  %1209 = vmatpush.msra.mxu0 %v24
  %1210 = vmatpush.msra.mxu0 %v20
  %1211 = vmatmul.f32.gmra.mxu0 %v1188
  %v1212 = vpop.f32.mrf.mxu0
  %v1213 = vadd.f32 0.0, %v1212
  %1214 = vdwg.mxu0
  %1215 = vmatpush.msra.mxu0 %v81
  %1216 = vmatpush.msra.mxu0 %v77
  %1217 = vmatpush.msra.mxu0 %v73
  %1218 = vmatpush.msra.mxu0 %v69
  %1219 = vmatpush.msra.mxu0 %v65
  %1220 = vmatpush.msra.mxu0 %v61
  %1221 = vmatpush.msra.mxu0 %v57
  %1222 = vmatpush.msra.mxu0 %v53
  %1223 = vmatpush.msra.mxu0 %v49
  %1224 = vmatpush.msra.mxu0 %v45
  %1225 = vmatpush.msra.mxu0 %v41
  %1226 = vmatpush.msra.mxu0 %v37
  %1227 = vmatpush.msra.mxu0 %v33
  %1228 = vmatpush.msra.mxu0 %v29
  %1229 = vmatpush.msra.mxu0 %v25
  %1230 = vmatpush.msra.mxu0 %v21
  %1231 = vmatmul.f32.gmra.mxu0 %v1188
  %v1232 = vpop.f32.mrf.mxu0
  %v1233 = vadd.f32 0.0, %v1232
  %1234 = vdwg.mxu0
  %1235 = vmatpush.msra.mxu0 %v82
  %1236 = vmatpush.msra.mxu0 %v78
  %1237 = vmatpush.msra.mxu0 %v74
  %1238 = vmatpush.msra.mxu0 %v70
  %1239 = vmatpush.msra.mxu0 %v66
  %1240 = vmatpush.msra.mxu0 %v62
  %1241 = vmatpush.msra.mxu0 %v58
  %1242 = vmatpush.msra.mxu0 %v54
  %1243 = vmatpush.msra.mxu0 %v50
  %1244 = vmatpush.msra.mxu0 %v46
  %1245 = vmatpush.msra.mxu0 %v42
  %1246 = vmatpush.msra.mxu0 %v38
  %1247 = vmatpush.msra.mxu0 %v34
  %1248 = vmatpush.msra.mxu0 %v30
  %1249 = vmatpush.msra.mxu0 %v26
  %1250 = vmatpush.msra.mxu0 %v22
  %1251 = vmatmul.f32.gmra.mxu0 %v1188
  %v1252 = vpop.f32.mrf.mxu0
  %v1253 = vadd.f32 0.0, %v1252
  %1254 = vdwg.mxu0
  %1255 = vmatpush.msra.mxu0 %v83
  %1256 = vmatpush.msra.mxu0 %v79
  %1257 = vmatpush.msra.mxu0 %v75
  %1258 = vmatpush.msra.mxu0 %v71
  %1259 = vmatpush.msra.mxu0 %v67
  %1260 = vmatpush.msra.mxu0 %v63
  %1261 = vmatpush.msra.mxu0 %v59
  %1262 = vmatpush.msra.mxu0 %v55
  %1263 = vmatpush.msra.mxu0 %v51
  %1264 = vmatpush.msra.mxu0 %v47
  %1265 = vmatpush.msra.mxu0 %v43
  %1266 = vmatpush.msra.mxu0 %v39
  %1267 = vmatpush.msra.mxu0 %v35
  %1268 = vmatpush.msra.mxu0 %v31
  %1269 = vmatpush.msra.mxu0 %v27
  %1270 = vmatpush.msra.mxu0 %v23
  %1271 = vmatmul.f32.gmra.mxu0 %v1188
  %v1272 = vpop.f32.mrf.mxu0
  %v1273 = vadd.f32 0.0, %v1272
  %1274 = vdwg.mxu0
  %v1275 = vadd.f32 %v1191, %v1213
  %v1276 = vadd.f32 %v1192, %v1233
  %v1277 = vadd.f32 %v1193, %v1253
  %v1278 = vadd.f32 %v1194, %v1273
  %v1279 = vxor.u32 %v1275, 2147483648
  %v1280 = vxor.u32 %v1276, 2147483648
  %v1281 = vxor.u32 %v1277, 2147483648
  %v1282 = vmul.f32 %v1279, 1.442695
  %v1283 = vpow.pop %v1282
  %v1284 = vmul.f32 %v1280, 1.442695
  %v1285 = vpow.pop %v1284
  %v1286 = vmul.f32 %v1281, 1.442695
  %v1287 = vpow.pop %v1286
  %v1288 = vadd.f32 %v1283, 1.0
  %v1289 = vadd.f32 %v1285, 1.0
  %v1290 = vadd.f32 %v1287, 1.0
  %v1291 = vrcp.pop %v1288
  %v1292 = vmul.f32 %v1288, %v1291
  %v1293 = vsub.f32 1.0, %v1292
  %v1294 = vmul.f32 %v1291, %v1293
  %v1295 = vadd.f32 %v1291, %v1294
  %vm1296 = vweird.f32 %v1288
  %vm1297 = vweird.f32 %v1291
  %vm1298 = vmor %vm1296, %vm1297
  %v1299 = vsel %vm1298, %v1291, %v1295
  %v1300 = vand.u32 2147483647, %v1288
  %vm1301 = vcmp.eq.f32.partialorder %v1300, 8.507059e+37
  %v1302 = vand.u32 %v1288, 2147483648
  %v1303 = vor.u32 1.1754944e-38, %v1302
  %v1304 = vsel %vm1301, %v1303, %v1299
  %v1305 = vmul.f32 1.0, %v1304
  %v1306 = vrcp.pop %v1289
  %v1307 = vmul.f32 %v1289, %v1306
  %v1308 = vsub.f32 1.0, %v1307
  %v1309 = vmul.f32 %v1306, %v1308
  %v1310 = vadd.f32 %v1306, %v1309
  %vm1311 = vweird.f32 %v1289
  %vm1312 = vweird.f32 %v1306
  %vm1313 = vmor %vm1311, %vm1312
  %v1314 = vsel %vm1313, %v1306, %v1310
  %v1315 = vand.u32 2147483647, %v1289
  %vm1316 = vcmp.eq.f32.partialorder %v1315, 8.507059e+37
  %v1317 = vand.u32 %v1289, 2147483648
  %v1318 = vor.u32 1.1754944e-38, %v1317
  %v1319 = vsel %vm1316, %v1318, %v1314
  %v1320 = vmul.f32 1.0, %v1319
  %v1321 = vrcp.pop %v1290
  %v1322 = vmul.f32 %v1290, %v1321
  %v1323 = vsub.f32 1.0, %v1322
  %v1324 = vmul.f32 %v1321, %v1323
  %v1325 = vadd.f32 %v1321, %v1324
  %vm1326 = vweird.f32 %v1290
  %vm1327 = vweird.f32 %v1321
  %vm1328 = vmor %vm1326, %vm1327
  %v1329 = vsel %vm1328, %v1321, %v1325
  %v1330 = vand.u32 2147483647, %v1290
  %vm1331 = vcmp.eq.f32.partialorder %v1330, 8.507059e+37
  %v1332 = vand.u32 %v1290, 2147483648
  %v1333 = vor.u32 1.1754944e-38, %v1332
  %v1334 = vsel %vm1331, %v1333, %v1329
  %v1335 = vmul.f32 1.0, %v1334
  %v1336 = vtanh.pop %v1278
  %v1337 = vmul.f32 %v1320, %v1189
  %v1338 = vmul.f32 %v1305, %v1336
  %v1339 = vadd.f32 %v1337, %v1338
  %v1340 = vtanh.pop %v1339
  %v1341 = vmul.f32 %v1335, %v1340
  %1342 = vst [vmem:[#allocation2] sm:$0xff] %v1341
  %1343 = vst [vmem:[#allocation3] sm:$0xff] %v1339
  %s1344 = scalar_lea.vmem %s2, 56
  %1345 = vst [vmem:[%s1344] sm:$0xff] %v1341
  // Predicated region
  $region14: #{encoder_forward.2} parent=0 // pred_check
    %p1346 = pneg %p14
  $region15: #{encoder_forward.2} parent=0 // pred_check_branch
    %1348 = sbr.rel (%p1346) target = $region17
  $region16: #{encoder_forward.2} parent=0 // pred_region
    %v1349 = vld [vmem:[#allocation2] sm:$0xff]
    %1350 = vst [vmem:[%s3] sm:$0xff] %v1349
    %v1351 = vld [vmem:[#allocation3] sm:$0xff]
    %1352 = vst [vmem:[%s4] sm:$0xff] %v1351
  $region17: #{encoder_forward.2} parent=0 // pred_fallthru
    _
  // Predicated region
  $region18: #{encoder_forward.2} parent=0 // pred_check
    _
  $region19: #{encoder_forward.2} parent=0 // pred_check_branch
    %1354 = sbr.rel (0) target = $region21
  $region20: #{encoder_forward.2} parent=0 // pred_region
    _
  $region21: #{encoder_forward.2} parent=0 // pred_fallthru
    _
  // Predicated region
  $region22: #{encoder_forward.2} parent=0 // pred_check
    _
  $region23: #{encoder_forward.2} parent=0 // pred_check_branch
    %1356 = sbr.rel (0) target = $region25
  $region24: #{encoder_forward.2} parent=0 // pred_region
    _
  $region25: #{encoder_forward.2} parent=0 // pred_fallthru
    _
  // Predicated region
  $region26: #{encoder_forward.2} parent=0 // pred_check
    _
  $region27: #{encoder_forward.2} parent=0 // pred_check_branch
    %1358 = sbr.rel (0) target = $region29
  $region28: #{encoder_forward.2} parent=0 // pred_region
    _
  $region29: #{encoder_forward.2} parent=0 // pred_fallthru
    _
  // Predicated region
  $region30: #{encoder_forward.2} parent=0 // pred_check
    _
  $region31: #{encoder_forward.2} parent=0 // pred_check_branch
    %1360 = sbr.rel (0) target = $region33
  $region32: #{encoder_forward.2} parent=0 // pred_region
    _
  $region33: #{encoder_forward.2} parent=0 // pred_fallthru
    _
  // Predicated region
  $region34: #{encoder_forward.2} parent=0 // pred_check
    _
  $region35: #{encoder_forward.2} parent=0 // pred_check_branch
    %1362 = sbr.rel (0) target = $region37
  $region36: #{encoder_forward.2} parent=0 // pred_region
    _
  $region37: #{encoder_forward.2} parent=0 // pred_fallthru
    _
  // Predicated region
  $region38: #{encoder_forward.2} parent=0 // pred_check
    _
  $region39: #{encoder_forward.2} parent=0 // pred_check_branch
    %1364 = sbr.rel (0) target = $region41
  $region40: #{encoder_forward.2} parent=0 // pred_region
    _
  $region41: #{encoder_forward.2} parent=0 // pred_fallthru
    _

</llo_original>
